<compile_context>
chip_gen: v5e
topology: v5e:2x2
jax: 0.10.0
libtpu: 0.0.40
codegen_flags: <defaults>
</compile_context>

<pallas_src>
import functools
import math

import jax
import jax.numpy as jnp
from jax.experimental import pallas as pl
from jax.experimental.pallas import tpu as pltpu


def _round_up(n, m):
  return ((n + m - 1) // m) * m


# ----------------------------- Fused Pallas kernel ---------------------------

def _fused_forward_kernel(
    # per-batch-element activations / mask
    h_ref, mask_ref,
    # embedding layernorm
    ln_emb_g, ln_emb_b,
    # attention block
    w_qkv, b_qkv, w_o, b_o, ln1_g, ln1_b,
    # feed-forward block
    w_ff1, b_ff1, w_ff2, b_ff2, ln2_g, ln2_b,
    # pooler + (lane-padded) space classification head
    w_pool, b_pool, w_lat, b_lat, w_cls, b_cls,
    # output
    o_ref,
    *, hidden, scale, eps):
  """Encoder layer + pooler + classifier head for ONE batch element.

  All intermediates stay in VMEM/vregs; per grid step the only HBM traffic is
  this element's [S, H] hidden block, its [1, S] key mask, the padded logits
  row, and (once, constant index map) the bf16 weights.
  """
  f32 = jnp.float32
  bf16 = jnp.bfloat16
  H = hidden

  def layernorm(x, g_ref, b_ref):
    mu = jnp.mean(x, axis=-1, keepdims=True)
    var = jnp.mean(jnp.square(x - mu), axis=-1, keepdims=True)
    return (x - mu) * jax.lax.rsqrt(var + eps) * g_ref[...] + b_ref[...]

  def dot_bf16(x, w_ref):
    # bf16 MXU inputs, f32 accumulation.
    return jnp.dot(x.astype(bf16), w_ref[...], preferred_element_type=f32)

  # Embedding layernorm (f32).
  h = layernorm(h_ref[...].astype(f32), ln_emb_g, ln_emb_b)          # [S, H]

  # Fused QKV projection: one [H, 3H] matmul; bias added in f32, then a single
  # bf16 cast; Q/K/V sliced at lane-aligned offsets (H is a multiple of 128).
  qkv = (dot_bf16(h, w_qkv) + b_qkv[...]).astype(bf16)               # [S, 3H]
  q = qkv[:, 0:H]
  k = qkv[:, H:2 * H]
  v = qkv[:, 2 * H:3 * H]

  # Per-example single-head self-attention.  Only the key-padding mask is
  # needed (batch lives on the grid, so there is no cross-batch masking).
  # q @ k^T with the transpose absorbed into the contraction (no XLU k.T).
  s = jax.lax.dot_general(q, k, (((1,), (1,)), ((), ())),
                          preferred_element_type=f32)                # [S, S]
  s = s * scale + mask_ref[...]                                      # [1,S] bcast
  s = s - jnp.max(s, axis=-1, keepdims=True)
  p = jnp.exp(s)
  p = p * pl.reciprocal(jnp.sum(p, axis=-1, keepdims=True), approx=True)
  ctx = jnp.dot(p.astype(bf16), v, preferred_element_type=f32)       # [S, H]

  # Output projection + residual + layernorm (residual kept in f32).
  h = layernorm(h + dot_bf16(ctx, w_o) + b_o[...], ln1_g, ln1_b)

  # Feed-forward block + residual + layernorm.
  # TODO(synk): HF BERT uses the exact erf GELU; tanh approximation used here.
  ff = jax.nn.gelu(dot_bf16(h, w_ff1) + b_ff1[...], approximate=True)
  h = layernorm(h + dot_bf16(ff, w_ff2) + b_ff2[...], ln2_g, ln2_b)  # [S, H]

  # [CLS] pooling = row 0 of this element's block (no one-hot matmul), then
  # pooler + lane-padded latent/concept-space classifier head -> padded logits.
  cls = h[0:1, :]                                                    # [1, H]
  pooled = jnp.tanh(dot_bf16(cls, w_pool) + b_pool[...])
  latent = dot_bf16(pooled, w_lat) + b_lat[...]                      # [1, Lp]
  logits = dot_bf16(latent, w_cls) + b_cls[...]                      # [1, Lp]
  o_ref[...] = logits.astype(o_ref.dtype)


# ------------------------------ Model forward --------------------------------

def init_params(key, vocab, max_pos, hidden, ffn, n_latent, num_labels):
  scale = 0.02
  ks = jax.random.split(key, 16)
  nrm = lambda k, shp: (scale * jax.random.normal(k, shp)).astype(jnp.float32)
  bf = lambda x: x.astype(jnp.bfloat16)   # MXU-input weights stored in bf16
  wq = nrm(ks[2], (hidden, hidden))
  wk = nrm(ks[3], (hidden, hidden))
  wv = nrm(ks[4], (hidden, hidden))
  return {
      "tok_emb": nrm(ks[0], (vocab, hidden)),
      "pos_emb": nrm(ks[1], (max_pos, hidden)),
      "ln_emb_g": jnp.ones((hidden,), jnp.float32),
      "ln_emb_b": jnp.zeros((hidden,), jnp.float32),
      # Fused QKV projection weight: [H, 3H].
      "w_qkv": bf(jnp.concatenate([wq, wk, wv], axis=1)),
      "b_qkv": jnp.zeros((3 * hidden,), jnp.float32),
      "w_o": bf(nrm(ks[5], (hidden, hidden))),
      "b_o": jnp.zeros((hidden,), jnp.float32),
      "ln1_g": jnp.ones((hidden,), jnp.float32),
      "ln1_b": jnp.zeros((hidden,), jnp.float32),
      "w_ff1": bf(nrm(ks[6], (hidden, ffn))),
      "b_ff1": jnp.zeros((ffn,), jnp.float32),
      "w_ff2": bf(nrm(ks[7], (ffn, hidden))),
      "b_ff2": jnp.zeros((hidden,), jnp.float32),
      "ln2_g": jnp.ones((hidden,), jnp.float32),
      "ln2_b": jnp.zeros((hidden,), jnp.float32),
      "w_pool": bf(nrm(ks[8], (hidden, hidden))),
      "b_pool": jnp.zeros((hidden,), jnp.float32),
      "w_latent": bf(nrm(ks[9], (hidden, n_latent))),
      "b_latent": jnp.zeros((n_latent,), jnp.float32),
      "w_cls": bf(nrm(ks[10], (n_latent, num_labels))),
      "b_cls": jnp.zeros((num_labels,), jnp.float32),
  }


def space_classifier_forward(params, input_ids, position_ids, attn_mask,
                             num_labels):
  """input_ids/position_ids: [B, S] int32, attn_mask: [B, 1, S] additive."""
  B, S = input_ids.shape
  H = params["tok_emb"].shape[1]

  # Embedding lookup stays in glue (gather); everything downstream is fused.
  # TODO(synk): at real vocab/seq sizes move this gather into the kernel via
  # PrefetchScalarGridSpec + Element-indexed BlockSpec on tok_emb.
  h = (jnp.take(params["tok_emb"], input_ids, axis=0)
       + jnp.take(params["pos_emb"], position_ids, axis=0))          # [B, S, H]

  # Additive key-padding mask only (per batch element), clamped to a large
  # finite negative so a fully-padded row can never NaN in the softmax.
  key_mask = jnp.maximum(attn_mask, jnp.float32(-1e30))              # [B, 1, S]

  # Lane-pad the tiny head (n_latent, num_labels) to 128 so the head matmuls
  # and the output store are lane-dense; padded weight columns/rows are zero,
  # so the first num_labels logits are exact and we slice them back outside.
  lat = params["w_latent"].shape[1]
  lab = params["w_cls"].shape[1]
  lat_p = _round_up(lat, 128)
  lab_p = _round_up(lab, 128)
  w_lat = jnp.zeros((H, lat_p), jnp.bfloat16).at[:, :lat].set(params["w_latent"])
  b_lat = jnp.zeros((lat_p,), jnp.float32).at[:lat].set(params["b_latent"])
  w_cls = jnp.zeros((lat_p, lab_p), jnp.bfloat16).at[:lat, :lab].set(params["w_cls"])
  b_cls = jnp.zeros((lab_p,), jnp.float32).at[:lab].set(params["b_cls"])

  row = lambda v: v.reshape(1, -1)
  weights = (
      row(params["ln_emb_g"]), row(params["ln_emb_b"]),
      params["w_qkv"], row(params["b_qkv"]),
      params["w_o"], row(params["b_o"]),
      row(params["ln1_g"]), row(params["ln1_b"]),
      params["w_ff1"], row(params["b_ff1"]),
      params["w_ff2"], row(params["b_ff2"]),
      row(params["ln2_g"]), row(params["ln2_b"]),
      params["w_pool"], row(params["b_pool"]),
      w_lat, row(b_lat),
      w_cls, row(b_cls),
  )

  def const_spec(x):
    # Full-array block with a CONSTANT index map: DMA'd once, resident across
    # the whole (batch) grid.
    nd = x.ndim
    return pl.BlockSpec(x.shape, lambda b: (0,) * nd)

  in_specs = (
      [pl.BlockSpec((None, S, H), lambda b: (b, 0, 0)),     # per-example hiddens
       pl.BlockSpec((None, 1, S), lambda b: (b, 0, 0))]      # per-example key mask
      + [const_spec(w) for w in weights])

  out = pl.pallas_call(
      functools.partial(_fused_forward_kernel,
                        hidden=H, scale=1.0 / math.sqrt(H), eps=1e-12),
      out_shape=jax.ShapeDtypeStruct((B, 1, lab_p), jnp.float32),
      grid=(B,),
      in_specs=in_specs,
      out_specs=pl.BlockSpec((None, 1, lab_p), lambda b: (b, 0, 0)),
      compiler_params=pltpu.CompilerParams(
          dimension_semantics=("parallel",),       # both v7x TCs share the batch
          vmem_limit_bytes=32 * 1024 * 1024),      # explicit (v5e default is 16MiB)
  )(h, key_mask, *weights)

  return out.reshape(B, lab_p)[:, :num_labels]


# ------------------------- Pure-JAX f32 reference ----------------------------

def reference_forward(params, input_ids, position_ids, attn_mask, eps=1e-12):
  """f32 reference of the same forward for tolerance checking the kernel."""
  f32 = jnp.float32
  H = params["tok_emb"].shape[1]

  def layernorm(x, g, b):
    mu = jnp.mean(x, axis=-1, keepdims=True)
    var = jnp.mean(jnp.square(x - mu), axis=-1, keepdims=True)
    return (x - mu) * jax.lax.rsqrt(var + eps) * g + b

  h = (jnp.take(params["tok_emb"], input_ids, axis=0)
       + jnp.take(params["pos_emb"], position_ids, axis=0)).astype(f32)
  h = layernorm(h, params["ln_emb_g"], params["ln_emb_b"])
  qkv = h @ params["w_qkv"].astype(f32) + params["b_qkv"]
  q, k, v = qkv[..., :H], qkv[..., H:2 * H], qkv[..., 2 * H:]
  s = jnp.einsum("bqh,bkh->bqk", q, k) / math.sqrt(H)
  s = s + jnp.maximum(attn_mask, jnp.float32(-1e30))      # [B,1,S] key mask
  p = jax.nn.softmax(s, axis=-1)
  ctx = jnp.einsum("bqk,bkh->bqh", p, v)
  h = layernorm(h + ctx @ params["w_o"].astype(f32) + params["b_o"],
                params["ln1_g"], params["ln1_b"])
  ff = jax.nn.gelu(h @ params["w_ff1"].astype(f32) + params["b_ff1"],
                   approximate=True)
  h = layernorm(h + ff @ params["w_ff2"].astype(f32) + params["b_ff2"],
                params["ln2_g"], params["ln2_b"])
  cls = h[:, 0, :]
  pooled = jnp.tanh(cls @ params["w_pool"].astype(f32) + params["b_pool"])
  latent = pooled @ params["w_latent"].astype(f32) + params["b_latent"]
  return latent @ params["w_cls"].astype(f32) + params["b_cls"]


# --------------------------------- Driver ------------------------------------

def build_batch(query, document_batch, pad_id, cls_id, sep_id, max_length,
                pad_multiple=8):
  """Mirrors SpaceClassifier.forward input assembly + PaddedSequence.autopad.

  The padded length is rounded up to a multiple of 8 (sublane alignment);
  extra columns are pad tokens with a -inf key mask, so they are inert.
  """
  assert len(query) == len(document_batch)
  input_tensors, position_ids = [], []
  for q, d in zip(query, document_batch):
    if len(q) + len(d) + 2 > max_length:
      d = d[: max_length - len(q) - 2]
    input_tensors.append([cls_id] + list(q) + [sep_id] + list(d))
    position_ids.append(list(range(0, len(q) + 1)) + list(range(0, len(d) + 1)))
  S = _round_up(max(len(t) for t in input_tensors), pad_multiple)
  B = len(input_tensors)
  ids = jnp.full((B, S), pad_id, dtype=jnp.int32)
  pos = jnp.zeros((B, S), dtype=jnp.int32)
  mask = jnp.full((B, 1, S), -jnp.inf, dtype=jnp.float32)
  for i, (t, p) in enumerate(zip(input_tensors, position_ids)):
    L = len(t)
    ids = ids.at[i, :L].set(jnp.array(t, dtype=jnp.int32))
    pos = pos.at[i, :L].set(jnp.array(p, dtype=jnp.int32))
    mask = mask.at[i, 0, :L].set(0.0)
  return ids, pos, mask


if __name__ == "__main__":
  # Hidden/FFN chosen as (small) multiples of 128 so QKV slices and all matmul
  # operands are lane-aligned, per the MXU-shape feedback.
  VOCAB, HIDDEN, FFN = 64, 128, 256
  N_LATENT, NUM_LABELS = 8, 3
  MAX_LENGTH = 16
  PAD_ID, CLS_ID, SEP_ID = 0, 1, 2

  key = jax.random.PRNGKey(0)
  k_params, k_q1, k_q2, k_d1, k_d2 = jax.random.split(key, 5)

  # Deterministic token id lists for query / document batch.
  query = [
      jax.random.randint(k_q1, (3,), 3, VOCAB).tolist(),
      jax.random.randint(k_q2, (4,), 3, VOCAB).tolist(),
  ]
  document_batch = [
      jax.random.randint(k_d1, (5,), 3, VOCAB).tolist(),
      jax.random.randint(k_d2, (7,), 3, VOCAB).tolist(),
  ]

  input_ids, position_ids, attn_mask = build_batch(
      query, document_batch, PAD_ID, CLS_ID, SEP_ID, MAX_LENGTH)

  params = init_params(k_params, VOCAB, MAX_LENGTH, HIDDEN, FFN,
                       N_LATENT, NUM_LABELS)

  fwd = jax.jit(functools.partial(space_classifier_forward,
                                  num_labels=NUM_LABELS))
  logits = fwd(params, input_ids, position_ids, attn_mask)
  jax.block_until_ready(logits)

  ref = reference_forward(params, input_ids, position_ids, attn_mask)

  assert logits.shape == (len(query), NUM_LABELS)
  assert bool(jnp.all(jnp.isfinite(logits)))
  # Tolerance vs pure-f32 reference (bf16 MXU inputs + approx reciprocal).
  assert bool(jnp.allclose(logits, ref, rtol=2e-2, atol=2e-3)), (
      float(jnp.max(jnp.abs(logits - ref))))
  print("KERNEL_OK")
</pallas_src>

<mosaic_0001>
module attributes {stable_mosaic.version = 11 : i64} {
  func.func @_fused_forward_kernel(%arg0: i32, %arg1: memref<1x16x128xf32, #tpu.memory_space<vmem>>, %arg2: memref<1x1x16xf32, #tpu.memory_space<vmem>>, %arg3: memref<1x128xf32, #tpu.memory_space<vmem>>, %arg4: memref<1x128xf32, #tpu.memory_space<vmem>>, %arg5: memref<128x384xbf16, #tpu.memory_space<vmem>>, %arg6: memref<1x384xf32, #tpu.memory_space<vmem>>, %arg7: memref<128x128xbf16, #tpu.memory_space<vmem>>, %arg8: memref<1x128xf32, #tpu.memory_space<vmem>>, %arg9: memref<1x128xf32, #tpu.memory_space<vmem>>, %arg10: memref<1x128xf32, #tpu.memory_space<vmem>>, %arg11: memref<128x256xbf16, #tpu.memory_space<vmem>>, %arg12: memref<1x256xf32, #tpu.memory_space<vmem>>, %arg13: memref<256x128xbf16, #tpu.memory_space<vmem>>, %arg14: memref<1x128xf32, #tpu.memory_space<vmem>>, %arg15: memref<1x128xf32, #tpu.memory_space<vmem>>, %arg16: memref<1x128xf32, #tpu.memory_space<vmem>>, %arg17: memref<128x128xbf16, #tpu.memory_space<vmem>>, %arg18: memref<1x128xf32, #tpu.memory_space<vmem>>, %arg19: memref<128x128xbf16, #tpu.memory_space<vmem>>, %arg20: memref<1x128xf32, #tpu.memory_space<vmem>>, %arg21: memref<128x128xbf16, #tpu.memory_space<vmem>>, %arg22: memref<1x128xf32, #tpu.memory_space<vmem>>, %arg23: memref<1x1x128xf32, #tpu.memory_space<vmem>>) attributes {dimension_semantics = [#tpu.dimension_semantics<parallel>], iteration_bounds = array<i64: 2>, scalar_prefetch = 0 : i64, scratch_operands = 0 : i64, tpu.core_type = #tpu.core_type<tc>, window_params = [{transform_indices = @transform_0, window_bounds = array<i64: 1, 16, 128>}, {transform_indices = @transform_1, window_bounds = array<i64: 1, 1, 16>}, {pipeline_mode = #tpu.pipeline_mode<synchronous>, transform_indices = @transform_2, window_bounds = array<i64: 1, 128>}, {pipeline_mode = #tpu.pipeline_mode<synchronous>, transform_indices = @transform_3, window_bounds = array<i64: 1, 128>}, {pipeline_mode = #tpu.pipeline_mode<synchronous>, transform_indices = @transform_4, window_bounds = array<i64: 128, 384>}, {pipeline_mode = #tpu.pipeline_mode<synchronous>, transform_indices = @transform_5, window_bounds = array<i64: 1, 384>}, {pipeline_mode = #tpu.pipeline_mode<synchronous>, transform_indices = @transform_6, window_bounds = array<i64: 128, 128>}, {pipeline_mode = #tpu.pipeline_mode<synchronous>, transform_indices = @transform_7, window_bounds = array<i64: 1, 128>}, {pipeline_mode = #tpu.pipeline_mode<synchronous>, transform_indices = @transform_8, window_bounds = array<i64: 1, 128>}, {pipeline_mode = #tpu.pipeline_mode<synchronous>, transform_indices = @transform_9, window_bounds = array<i64: 1, 128>}, {pipeline_mode = #tpu.pipeline_mode<synchronous>, transform_indices = @transform_10, window_bounds = array<i64: 128, 256>}, {pipeline_mode = #tpu.pipeline_mode<synchronous>, transform_indices = @transform_11, window_bounds = array<i64: 1, 256>}, {pipeline_mode = #tpu.pipeline_mode<synchronous>, transform_indices = @transform_12, window_bounds = array<i64: 256, 128>}, {pipeline_mode = #tpu.pipeline_mode<synchronous>, transform_indices = @transform_13, window_bounds = array<i64: 1, 128>}, {pipeline_mode = #tpu.pipeline_mode<synchronous>, transform_indices = @transform_14, window_bounds = array<i64: 1, 128>}, {pipeline_mode = #tpu.pipeline_mode<synchronous>, transform_indices = @transform_15, window_bounds = array<i64: 1, 128>}, {pipeline_mode = #tpu.pipeline_mode<synchronous>, transform_indices = @transform_16, window_bounds = array<i64: 128, 128>}, {pipeline_mode = #tpu.pipeline_mode<synchronous>, transform_indices = @transform_17, window_bounds = array<i64: 1, 128>}, {pipeline_mode = #tpu.pipeline_mode<synchronous>, transform_indices = @transform_18, window_bounds = array<i64: 128, 128>}, {pipeline_mode = #tpu.pipeline_mode<synchronous>, transform_indices = @transform_19, window_bounds = array<i64: 1, 128>}, {pipeline_mode = #tpu.pipeline_mode<synchronous>, transform_indices = @transform_20, window_bounds = array<i64: 128, 128>}, {pipeline_mode = #tpu.pipeline_mode<synchronous>, transform_indices = @transform_21, window_bounds = array<i64: 1, 128>}, {transform_indices = @transform_22, window_bounds = array<i64: 1, 1, 128>}]} {
    %c0 = arith.constant 0 : index
    %c0_0 = arith.constant 0 : index
    %c0_1 = arith.constant 0 : index
    %0 = vector.load %arg1[%c0, %c0_0, %c0_1] : memref<1x16x128xf32, #tpu.memory_space<vmem>>, vector<1x16x128xf32>
    %1 = vector.shape_cast %0 : vector<1x16x128xf32> to vector<16x128xf32>
    %cst = arith.constant dense<0.000000e+00> : vector<16xf32>
    %2 = vector.multi_reduction <add>, %1, %cst [1] : vector<16x128xf32> to vector<16xf32>
    %3 = vector.shape_cast %2 : vector<16xf32> to vector<16x1xf32>
    %cst_2 = arith.constant 1.280000e+02 : f32
    %4 = vector.broadcast %cst_2 : f32 to vector<16x1xf32>
    %5 = arith.divf %3, %4 : vector<16x1xf32>
    %6 = vector.broadcast %5 : vector<16x1xf32> to vector<16x128xf32>
    %7 = arith.subf %1, %6 : vector<16x128xf32>
    %8 = arith.mulf %7, %7 : vector<16x128xf32>
    %cst_3 = arith.constant dense<0.000000e+00> : vector<16xf32>
    %9 = vector.multi_reduction <add>, %8, %cst_3 [1] : vector<16x128xf32> to vector<16xf32>
    %10 = vector.shape_cast %9 : vector<16xf32> to vector<16x1xf32>
    %cst_4 = arith.constant 1.280000e+02 : f32
    %11 = vector.broadcast %cst_4 : f32 to vector<16x1xf32>
    %12 = arith.divf %10, %11 : vector<16x1xf32>
    %13 = vector.broadcast %5 : vector<16x1xf32> to vector<16x128xf32>
    %14 = arith.subf %1, %13 : vector<16x128xf32>
    %cst_5 = arith.constant 9.99999996E-13 : f32
    %15 = vector.broadcast %cst_5 : f32 to vector<16x1xf32>
    %16 = arith.addf %12, %15 : vector<16x1xf32>
    %17 = math.rsqrt %16 : vector<16x1xf32>
    %18 = vector.broadcast %17 : vector<16x1xf32> to vector<16x128xf32>
    %19 = arith.mulf %14, %18 : vector<16x128xf32>
    %c0_6 = arith.constant 0 : index
    %c0_7 = arith.constant 0 : index
    %20 = vector.load %arg3[%c0_6, %c0_7] : memref<1x128xf32, #tpu.memory_space<vmem>>, vector<1x128xf32>
    %21 = vector.broadcast %20 : vector<1x128xf32> to vector<16x128xf32>
    %22 = arith.mulf %19, %21 : vector<16x128xf32>
    %c0_8 = arith.constant 0 : index
    %c0_9 = arith.constant 0 : index
    %23 = vector.load %arg4[%c0_8, %c0_9] : memref<1x128xf32, #tpu.memory_space<vmem>>, vector<1x128xf32>
    %24 = vector.broadcast %23 : vector<1x128xf32> to vector<16x128xf32>
    %25 = arith.addf %22, %24 : vector<16x128xf32>
    %26 = arith.truncf %25 : vector<16x128xf32> to vector<16x128xbf16>
    %c0_10 = arith.constant 0 : index
    %c0_11 = arith.constant 0 : index
    %27 = vector.load %arg5[%c0_10, %c0_11] : memref<128x384xbf16, #tpu.memory_space<vmem>>, vector<128x384xbf16>
    %cst_12 = arith.constant dense<0.000000e+00> : vector<16x384xf32>
    %28 = tpu.matmul %26, %27, %cst_12 {dimension_numbers = #tpu.dot_dimension_numbers<[1], [0], [0], [1], [0, 0, 1, 1], [], []>} : vector<16x128xbf16>, vector<128x384xbf16>, vector<16x384xf32> -> vector<16x384xf32>
    %c0_13 = arith.constant 0 : index
    %c0_14 = arith.constant 0 : index
    %29 = vector.load %arg6[%c0_13, %c0_14] : memref<1x384xf32, #tpu.memory_space<vmem>>, vector<1x384xf32>
    %30 = vector.broadcast %29 : vector<1x384xf32> to vector<16x384xf32>
    %31 = arith.addf %28, %30 : vector<16x384xf32>
    %32 = arith.truncf %31 : vector<16x384xf32> to vector<16x384xbf16>
    %33 = vector.extract_strided_slice %32 {offsets = [0, 0], sizes = [16, 128], strides = [1, 1]} : vector<16x384xbf16> to vector<16x128xbf16>
    %34 = vector.extract_strided_slice %32 {offsets = [0, 128], sizes = [16, 128], strides = [1, 1]} : vector<16x384xbf16> to vector<16x128xbf16>
    %35 = vector.extract_strided_slice %32 {offsets = [0, 256], sizes = [16, 128], strides = [1, 1]} : vector<16x384xbf16> to vector<16x128xbf16>
    %cst_15 = arith.constant dense<0.000000e+00> : vector<16x16xf32>
    %36 = tpu.matmul %33, %34, %cst_15 {dimension_numbers = #tpu.dot_dimension_numbers<[1], [1], [0], [0], [0, 0, 1, 0], [], []>} : vector<16x128xbf16>, vector<16x128xbf16>, vector<16x16xf32> -> vector<16x16xf32>
    %cst_16 = arith.constant 0.0883883461 : f32
    %37 = vector.broadcast %cst_16 : f32 to vector<16x16xf32>
    %38 = arith.mulf %36, %37 : vector<16x16xf32>
    %c0_17 = arith.constant 0 : index
    %c0_18 = arith.constant 0 : index
    %c0_19 = arith.constant 0 : index
    %39 = vector.load %arg2[%c0_17, %c0_18, %c0_19] : memref<1x1x16xf32, #tpu.memory_space<vmem>>, vector<1x1x16xf32>
    %40 = vector.shape_cast %39 : vector<1x1x16xf32> to vector<1x16xf32>
    %41 = vector.broadcast %40 : vector<1x16xf32> to vector<16x16xf32>
    %42 = arith.addf %38, %41 : vector<16x16xf32>
    %cst_20 = arith.constant dense<0xFF800000> : vector<16xf32>
    %43 = vector.multi_reduction <maximumf>, %42, %cst_20 [1] : vector<16x16xf32> to vector<16xf32>
    %44 = vector.shape_cast %43 : vector<16xf32> to vector<16x1xf32>
    %45 = vector.broadcast %44 : vector<16x1xf32> to vector<16x16xf32>
    %46 = arith.subf %42, %45 : vector<16x16xf32>
    %47 = math.exp %46 : vector<16x16xf32>
    %cst_21 = arith.constant dense<0.000000e+00> : vector<16xf32>
    %48 = vector.multi_reduction <add>, %47, %cst_21 [1] : vector<16x16xf32> to vector<16xf32>
    %49 = vector.shape_cast %48 : vector<16xf32> to vector<16x1xf32>
    %50 = tpu.reciprocal %49 {approx = true} : vector<16x1xf32> -> vector<16x1xf32>
    %51 = vector.broadcast %50 : vector<16x1xf32> to vector<16x16xf32>
    %52 = arith.mulf %47, %51 : vector<16x16xf32>
    %53 = arith.truncf %52 : vector<16x16xf32> to vector<16x16xbf16>
    %cst_22 = arith.constant dense<0.000000e+00> : vector<16x128xf32>
    %54 = tpu.matmul %53, %35, %cst_22 {dimension_numbers = #tpu.dot_dimension_numbers<[1], [0], [0], [1], [0, 0, 1, 1], [], []>} : vector<16x16xbf16>, vector<16x128xbf16>, vector<16x128xf32> -> vector<16x128xf32>
    %55 = arith.truncf %54 : vector<16x128xf32> to vector<16x128xbf16>
    %c0_23 = arith.constant 0 : index
    %c0_24 = arith.constant 0 : index
    %56 = vector.load %arg7[%c0_23, %c0_24] : memref<128x128xbf16, #tpu.memory_space<vmem>>, vector<128x128xbf16>
    %cst_25 = arith.constant dense<0.000000e+00> : vector<16x128xf32>
    %57 = tpu.matmul %55, %56, %cst_25 {dimension_numbers = #tpu.dot_dimension_numbers<[1], [0], [0], [1], [0, 0, 1, 1], [], []>} : vector<16x128xbf16>, vector<128x128xbf16>, vector<16x128xf32> -> vector<16x128xf32>
    %58 = arith.addf %25, %57 : vector<16x128xf32>
    %c0_26 = arith.constant 0 : index
    %c0_27 = arith.constant 0 : index
    %59 = vector.load %arg8[%c0_26, %c0_27] : memref<1x128xf32, #tpu.memory_space<vmem>>, vector<1x128xf32>
    %60 = vector.broadcast %59 : vector<1x128xf32> to vector<16x128xf32>
    %61 = arith.addf %58, %60 : vector<16x128xf32>
    %cst_28 = arith.constant dense<0.000000e+00> : vector<16xf32>
    %62 = vector.multi_reduction <add>, %61, %cst_28 [1] : vector<16x128xf32> to vector<16xf32>
    %63 = vector.shape_cast %62 : vector<16xf32> to vector<16x1xf32>
    %cst_29 = arith.constant 1.280000e+02 : f32
    %64 = vector.broadcast %cst_29 : f32 to vector<16x1xf32>
    %65 = arith.divf %63, %64 : vector<16x1xf32>
    %66 = vector.broadcast %65 : vector<16x1xf32> to vector<16x128xf32>
    %67 = arith.subf %61, %66 : vector<16x128xf32>
    %68 = arith.mulf %67, %67 : vector<16x128xf32>
    %cst_30 = arith.constant dense<0.000000e+00> : vector<16xf32>
    %69 = vector.multi_reduction <add>, %68, %cst_30 [1] : vector<16x128xf32> to vector<16xf32>
    %70 = vector.shape_cast %69 : vector<16xf32> to vector<16x1xf32>
    %cst_31 = arith.constant 1.280000e+02 : f32
    %71 = vector.broadcast %cst_31 : f32 to vector<16x1xf32>
    %72 = arith.divf %70, %71 : vector<16x1xf32>
    %73 = vector.broadcast %65 : vector<16x1xf32> to vector<16x128xf32>
    %74 = arith.subf %61, %73 : vector<16x128xf32>
    %cst_32 = arith.constant 9.99999996E-13 : f32
    %75 = vector.broadcast %cst_32 : f32 to vector<16x1xf32>
    %76 = arith.addf %72, %75 : vector<16x1xf32>
    %77 = math.rsqrt %76 : vector<16x1xf32>
    %78 = vector.broadcast %77 : vector<16x1xf32> to vector<16x128xf32>
    %79 = arith.mulf %74, %78 : vector<16x128xf32>
    %c0_33 = arith.constant 0 : index
    %c0_34 = arith.constant 0 : index
    %80 = vector.load %arg9[%c0_33, %c0_34] : memref<1x128xf32, #tpu.memory_space<vmem>>, vector<1x128xf32>
    %81 = vector.broadcast %80 : vector<1x128xf32> to vector<16x128xf32>
    %82 = arith.mulf %79, %81 : vector<16x128xf32>
    %c0_35 = arith.constant 0 : index
    %c0_36 = arith.constant 0 : index
    %83 = vector.load %arg10[%c0_35, %c0_36] : memref<1x128xf32, #tpu.memory_space<vmem>>, vector<1x128xf32>
    %84 = vector.broadcast %83 : vector<1x128xf32> to vector<16x128xf32>
    %85 = arith.addf %82, %84 : vector<16x128xf32>
    %86 = arith.truncf %85 : vector<16x128xf32> to vector<16x128xbf16>
    %c0_37 = arith.constant 0 : index
    %c0_38 = arith.constant 0 : index
    %87 = vector.load %arg11[%c0_37, %c0_38] : memref<128x256xbf16, #tpu.memory_space<vmem>>, vector<128x256xbf16>
    %cst_39 = arith.constant dense<0.000000e+00> : vector<16x256xf32>
    %88 = tpu.matmul %86, %87, %cst_39 {dimension_numbers = #tpu.dot_dimension_numbers<[1], [0], [0], [1], [0, 0, 1, 1], [], []>} : vector<16x128xbf16>, vector<128x256xbf16>, vector<16x256xf32> -> vector<16x256xf32>
    %c0_40 = arith.constant 0 : index
    %c0_41 = arith.constant 0 : index
    %89 = vector.load %arg12[%c0_40, %c0_41] : memref<1x256xf32, #tpu.memory_space<vmem>>, vector<1x256xf32>
    %90 = vector.broadcast %89 : vector<1x256xf32> to vector<16x256xf32>
    %91 = arith.addf %88, %90 : vector<16x256xf32>
    %92 = arith.mulf %91, %91 : vector<16x256xf32>
    %93 = arith.mulf %91, %92 : vector<16x256xf32>
    %cst_42 = arith.constant 4.471500e-02 : f32
    %94 = vector.broadcast %cst_42 : f32 to vector<16x256xf32>
    %95 = arith.mulf %94, %93 : vector<16x256xf32>
    %96 = arith.addf %91, %95 : vector<16x256xf32>
    %cst_43 = arith.constant 0.797884583 : f32
    %97 = vector.broadcast %cst_43 : f32 to vector<16x256xf32>
    %98 = arith.mulf %97, %96 : vector<16x256xf32>
    %99 = math.tanh %98 : vector<16x256xf32>
    %cst_44 = arith.constant 1.000000e+00 : f32
    %100 = vector.broadcast %cst_44 : f32 to vector<16x256xf32>
    %101 = arith.addf %100, %99 : vector<16x256xf32>
    %cst_45 = arith.constant 5.000000e-01 : f32
    %102 = vector.broadcast %cst_45 : f32 to vector<16x256xf32>
    %103 = arith.mulf %102, %101 : vector<16x256xf32>
    %104 = arith.mulf %91, %103 : vector<16x256xf32>
    %105 = arith.truncf %104 : vector<16x256xf32> to vector<16x256xbf16>
    %c0_46 = arith.constant 0 : index
    %c0_47 = arith.constant 0 : index
    %106 = vector.load %arg13[%c0_46, %c0_47] : memref<256x128xbf16, #tpu.memory_space<vmem>>, vector<256x128xbf16>
    %cst_48 = arith.constant dense<0.000000e+00> : vector<16x128xf32>
    %107 = tpu.matmul %105, %106, %cst_48 {dimension_numbers = #tpu.dot_dimension_numbers<[1], [0], [0], [1], [0, 0, 1, 1], [], []>} : vector<16x256xbf16>, vector<256x128xbf16>, vector<16x128xf32> -> vector<16x128xf32>
    %108 = arith.addf %85, %107 : vector<16x128xf32>
    %c0_49 = arith.constant 0 : index
    %c0_50 = arith.constant 0 : index
    %109 = vector.load %arg14[%c0_49, %c0_50] : memref<1x128xf32, #tpu.memory_space<vmem>>, vector<1x128xf32>
    %110 = vector.broadcast %109 : vector<1x128xf32> to vector<16x128xf32>
    %111 = arith.addf %108, %110 : vector<16x128xf32>
    %cst_51 = arith.constant dense<0.000000e+00> : vector<16xf32>
    %112 = vector.multi_reduction <add>, %111, %cst_51 [1] : vector<16x128xf32> to vector<16xf32>
    %113 = vector.shape_cast %112 : vector<16xf32> to vector<16x1xf32>
    %cst_52 = arith.constant 1.280000e+02 : f32
    %114 = vector.broadcast %cst_52 : f32 to vector<16x1xf32>
    %115 = arith.divf %113, %114 : vector<16x1xf32>
    %116 = vector.broadcast %115 : vector<16x1xf32> to vector<16x128xf32>
    %117 = arith.subf %111, %116 : vector<16x128xf32>
    %118 = arith.mulf %117, %117 : vector<16x128xf32>
    %cst_53 = arith.constant dense<0.000000e+00> : vector<16xf32>
    %119 = vector.multi_reduction <add>, %118, %cst_53 [1] : vector<16x128xf32> to vector<16xf32>
    %120 = vector.shape_cast %119 : vector<16xf32> to vector<16x1xf32>
    %cst_54 = arith.constant 1.280000e+02 : f32
    %121 = vector.broadcast %cst_54 : f32 to vector<16x1xf32>
    %122 = arith.divf %120, %121 : vector<16x1xf32>
    %123 = vector.broadcast %115 : vector<16x1xf32> to vector<16x128xf32>
    %124 = arith.subf %111, %123 : vector<16x128xf32>
    %cst_55 = arith.constant 9.99999996E-13 : f32
    %125 = vector.broadcast %cst_55 : f32 to vector<16x1xf32>
    %126 = arith.addf %122, %125 : vector<16x1xf32>
    %127 = math.rsqrt %126 : vector<16x1xf32>
    %128 = vector.broadcast %127 : vector<16x1xf32> to vector<16x128xf32>
    %129 = arith.mulf %124, %128 : vector<16x128xf32>
    %c0_56 = arith.constant 0 : index
    %c0_57 = arith.constant 0 : index
    %130 = vector.load %arg15[%c0_56, %c0_57] : memref<1x128xf32, #tpu.memory_space<vmem>>, vector<1x128xf32>
    %131 = vector.broadcast %130 : vector<1x128xf32> to vector<16x128xf32>
    %132 = arith.mulf %129, %131 : vector<16x128xf32>
    %c0_58 = arith.constant 0 : index
    %c0_59 = arith.constant 0 : index
    %133 = vector.load %arg16[%c0_58, %c0_59] : memref<1x128xf32, #tpu.memory_space<vmem>>, vector<1x128xf32>
    %134 = vector.broadcast %133 : vector<1x128xf32> to vector<16x128xf32>
    %135 = arith.addf %132, %134 : vector<16x128xf32>
    %136 = vector.extract_strided_slice %135 {offsets = [0, 0], sizes = [1, 128], strides = [1, 1]} : vector<16x128xf32> to vector<1x128xf32>
    %137 = arith.truncf %136 : vector<1x128xf32> to vector<1x128xbf16>
    %c0_60 = arith.constant 0 : index
    %c0_61 = arith.constant 0 : index
    %138 = vector.load %arg17[%c0_60, %c0_61] : memref<128x128xbf16, #tpu.memory_space<vmem>>, vector<128x128xbf16>
    %cst_62 = arith.constant dense<0.000000e+00> : vector<1x128xf32>
    %139 = tpu.matmul %137, %138, %cst_62 {dimension_numbers = #tpu.dot_dimension_numbers<[1], [0], [0], [1], [0, 0, 1, 1], [], []>} : vector<1x128xbf16>, vector<128x128xbf16>, vector<1x128xf32> -> vector<1x128xf32>
    %c0_63 = arith.constant 0 : index
    %c0_64 = arith.constant 0 : index
    %140 = vector.load %arg18[%c0_63, %c0_64] : memref<1x128xf32, #tpu.memory_space<vmem>>, vector<1x128xf32>
    %141 = arith.addf %139, %140 : vector<1x128xf32>
    %142 = math.tanh %141 : vector<1x128xf32>
    %143 = arith.truncf %142 : vector<1x128xf32> to vector<1x128xbf16>
    %c0_65 = arith.constant 0 : index
    %c0_66 = arith.constant 0 : index
    %144 = vector.load %arg19[%c0_65, %c0_66] : memref<128x128xbf16, #tpu.memory_space<vmem>>, vector<128x128xbf16>
    %cst_67 = arith.constant dense<0.000000e+00> : vector<1x128xf32>
    %145 = tpu.matmul %143, %144, %cst_67 {dimension_numbers = #tpu.dot_dimension_numbers<[1], [0], [0], [1], [0, 0, 1, 1], [], []>} : vector<1x128xbf16>, vector<128x128xbf16>, vector<1x128xf32> -> vector<1x128xf32>
    %c0_68 = arith.constant 0 : index
    %c0_69 = arith.constant 0 : index
    %146 = vector.load %arg20[%c0_68, %c0_69] : memref<1x128xf32, #tpu.memory_space<vmem>>, vector<1x128xf32>
    %147 = arith.addf %145, %146 : vector<1x128xf32>
    %148 = arith.truncf %147 : vector<1x128xf32> to vector<1x128xbf16>
    %c0_70 = arith.constant 0 : index
    %c0_71 = arith.constant 0 : index
    %149 = vector.load %arg21[%c0_70, %c0_71] : memref<128x128xbf16, #tpu.memory_space<vmem>>, vector<128x128xbf16>
    %cst_72 = arith.constant dense<0.000000e+00> : vector<1x128xf32>
    %150 = tpu.matmul %148, %149, %cst_72 {dimension_numbers = #tpu.dot_dimension_numbers<[1], [0], [0], [1], [0, 0, 1, 1], [], []>} : vector<1x128xbf16>, vector<128x128xbf16>, vector<1x128xf32> -> vector<1x128xf32>
    %c0_73 = arith.constant 0 : index
    %c0_74 = arith.constant 0 : index
    %151 = vector.load %arg22[%c0_73, %c0_74] : memref<1x128xf32, #tpu.memory_space<vmem>>, vector<1x128xf32>
    %152 = arith.addf %150, %151 : vector<1x128xf32>
    %c0_75 = arith.constant 0 : index
    %c0_76 = arith.constant 0 : index
    %c0_77 = arith.constant 0 : index
    %153 = vector.load %arg23[%c0_75, %c0_76, %c0_77] : memref<1x1x128xf32, #tpu.memory_space<vmem>>, vector<1x1x128xf32>
    %154 = vector.shape_cast %153 : vector<1x1x128xf32> to vector<1x128xf32>
    %155 = vector.shape_cast %152 : vector<1x128xf32> to vector<1x1x128xf32>
    tpu.vector_store %arg23[%c0_75, %c0_76, %c0_77], %155 {strides = array<i32>} : memref<1x1x128xf32, #tpu.memory_space<vmem>>, vector<1x1x128xf32>,
    return
  }
  func.func @transform_0(%arg0: i32) -> (i32, i32, i32) {
    %c0_i32 = arith.constant 0 : i32
    %c0_i32_0 = arith.constant 0 : i32
    %c0_i32_1 = arith.constant 0 : i32
    return %arg0, %c0_i32, %c0_i32_0 : i32, i32, i32
  }
  func.func @transform_1(%arg0: i32) -> (i32, i32, i32) {
    %c0_i32 = arith.constant 0 : i32
    %c0_i32_0 = arith.constant 0 : i32
    %c0_i32_1 = arith.constant 0 : i32
    return %arg0, %c0_i32, %c0_i32_0 : i32, i32, i32
  }
  func.func @transform_2(%arg0: i32) -> (i32, i32) {
    %c0_i32 = arith.constant 0 : i32
    %c0_i32_0 = arith.constant 0 : i32
    %c0_i32_1 = arith.constant 0 : i32
    return %c0_i32, %c0_i32_0 : i32, i32
  }
  func.func @transform_3(%arg0: i32) -> (i32, i32) {
    %c0_i32 = arith.constant 0 : i32
    %c0_i32_0 = arith.constant 0 : i32
    %c0_i32_1 = arith.constant 0 : i32
    return %c0_i32, %c0_i32_0 : i32, i32
  }
  func.func @transform_4(%arg0: i32) -> (i32, i32) {
    %c0_i32 = arith.constant 0 : i32
    %c0_i32_0 = arith.constant 0 : i32
    %c0_i32_1 = arith.constant 0 : i32
    return %c0_i32, %c0_i32_0 : i32, i32
  }
  func.func @transform_5(%arg0: i32) -> (i32, i32) {
    %c0_i32 = arith.constant 0 : i32
    %c0_i32_0 = arith.constant 0 : i32
    %c0_i32_1 = arith.constant 0 : i32
    return %c0_i32, %c0_i32_0 : i32, i32
  }
  func.func @transform_6(%arg0: i32) -> (i32, i32) {
    %c0_i32 = arith.constant 0 : i32
    %c0_i32_0 = arith.constant 0 : i32
    %c0_i32_1 = arith.constant 0 : i32
    return %c0_i32, %c0_i32_0 : i32, i32
  }
  func.func @transform_7(%arg0: i32) -> (i32, i32) {
    %c0_i32 = arith.constant 0 : i32
    %c0_i32_0 = arith.constant 0 : i32
    %c0_i32_1 = arith.constant 0 : i32
    return %c0_i32, %c0_i32_0 : i32, i32
  }
  func.func @transform_8(%arg0: i32) -> (i32, i32) {
    %c0_i32 = arith.constant 0 : i32
    %c0_i32_0 = arith.constant 0 : i32
    %c0_i32_1 = arith.constant 0 : i32
    return %c0_i32, %c0_i32_0 : i32, i32
  }
  func.func @transform_9(%arg0: i32) -> (i32, i32) {
    %c0_i32 = arith.constant 0 : i32
    %c0_i32_0 = arith.constant 0 : i32
    %c0_i32_1 = arith.constant 0 : i32
    return %c0_i32, %c0_i32_0 : i32, i32
  }
  func.func @transform_10(%arg0: i32) -> (i32, i32) {
    %c0_i32 = arith.constant 0 : i32
    %c0_i32_0 = arith.constant 0 : i32
    %c0_i32_1 = arith.constant 0 : i32
    return %c0_i32, %c0_i32_0 : i32, i32
  }
  func.func @transform_11(%arg0: i32) -> (i32, i32) {
    %c0_i32 = arith.constant 0 : i32
    %c0_i32_0 = arith.constant 0 : i32
    %c0_i32_1 = arith.constant 0 : i32
    return %c0_i32, %c0_i32_0 : i32, i32
  }
  func.func @transform_12(%arg0: i32) -> (i32, i32) {
    %c0_i32 = arith.constant 0 : i32
    %c0_i32_0 = arith.constant 0 : i32
    %c0_i32_1 = arith.constant 0 : i32
    return %c0_i32, %c0_i32_0 : i32, i32
  }
  func.func @transform_13(%arg0: i32) -> (i32, i32) {
    %c0_i32 = arith.constant 0 : i32
    %c0_i32_0 = arith.constant 0 : i32
    %c0_i32_1 = arith.constant 0 : i32
    return %c0_i32, %c0_i32_0 : i32, i32
  }
  func.func @transform_14(%arg0: i32) -> (i32, i32) {
    %c0_i32 = arith.constant 0 : i32
    %c0_i32_0 = arith.constant 0 : i32
    %c0_i32_1 = arith.constant 0 : i32
    return %c0_i32, %c0_i32_0 : i32, i32
  }
  func.func @transform_15(%arg0: i32) -> (i32, i32) {
    %c0_i32 = arith.constant 0 : i32
    %c0_i32_0 = arith.constant 0 : i32
    %c0_i32_1 = arith.constant 0 : i32
    return %c0_i32, %c0_i32_0 : i32, i32
  }
  func.func @transform_16(%arg0: i32) -> (i32, i32) {
    %c0_i32 = arith.constant 0 : i32
    %c0_i32_0 = arith.constant 0 : i32
    %c0_i32_1 = arith.constant 0 : i32
    return %c0_i32, %c0_i32_0 : i32, i32
  }
  func.func @transform_17(%arg0: i32) -> (i32, i32) {
    %c0_i32 = arith.constant 0 : i32
    %c0_i32_0 = arith.constant 0 : i32
    %c0_i32_1 = arith.constant 0 : i32
    return %c0_i32, %c0_i32_0 : i32, i32
  }
  func.func @transform_18(%arg0: i32) -> (i32, i32) {
    %c0_i32 = arith.constant 0 : i32
    %c0_i32_0 = arith.constant 0 : i32
    %c0_i32_1 = arith.constant 0 : i32
    return %c0_i32, %c0_i32_0 : i32, i32
  }
  func.func @transform_19(%arg0: i32) -> (i32, i32) {
    %c0_i32 = arith.constant 0 : i32
    %c0_i32_0 = arith.constant 0 : i32
    %c0_i32_1 = arith.constant 0 : i32
    return %c0_i32, %c0_i32_0 : i32, i32
  }
  func.func @transform_20(%arg0: i32) -> (i32, i32) {
    %c0_i32 = arith.constant 0 : i32
    %c0_i32_0 = arith.constant 0 : i32
    %c0_i32_1 = arith.constant 0 : i32
    return %c0_i32, %c0_i32_0 : i32, i32
  }
  func.func @transform_21(%arg0: i32) -> (i32, i32) {
    %c0_i32 = arith.constant 0 : i32
    %c0_i32_0 = arith.constant 0 : i32
    %c0_i32_1 = arith.constant 0 : i32
    return %c0_i32, %c0_i32_0 : i32, i32
  }
  func.func @transform_22(%arg0: i32) -> (i32, i32, i32) {
    %c0_i32 = arith.constant 0 : i32
    %c0_i32_0 = arith.constant 0 : i32
    %c0_i32_1 = arith.constant 0 : i32
    return %arg0, %c0_i32, %c0_i32_0 : i32, i32, i32
  }
}

</mosaic_0001>

<llo_original>
// kernel: space_classifier_forward.1
$region0: #{space_classifier_forward.1}
  #allocation0 [shape = 'u32[]', space=smem, size = 0x4, offset = 0x4, fixed_abs, tag = 'smem constant byte address 0x4 - core index']
  #allocation1 [shape = 'u32[72,128]{1,0:T(1,128)}', space=vmem, size = 0x9000, scoped, tag = 'internal scratch']
  %s0 = inlined_call_operand.vmem [shape: f32[2,16,128], index: 0, kind: input, shape index: {}]
  %s1 = inlined_call_operand.vmem [shape: f32[2,1,16], index: 1, kind: input, shape index: {}]
  %s2 = inlined_call_operand.vmem [shape: f32[1,128], index: 2, kind: input, shape index: {}]
  %s3 = inlined_call_operand.vmem [shape: f32[1,128], index: 3, kind: input, shape index: {}]
  %s4 = inlined_call_operand.vmem [shape: bf16[128,384], index: 4, kind: input, shape index: {}]
  %s5 = inlined_call_operand.vmem [shape: f32[1,384], index: 5, kind: input, shape index: {}]
  %s6 = inlined_call_operand.vmem [shape: bf16[128,128], index: 6, kind: input, shape index: {}]
  %s7 = inlined_call_operand.vmem [shape: f32[1,128], index: 7, kind: input, shape index: {}]
  %s8 = inlined_call_operand.vmem [shape: f32[1,128], index: 8, kind: input, shape index: {}]
  %s9 = inlined_call_operand.vmem [shape: f32[1,128], index: 9, kind: input, shape index: {}]
  %s10 = inlined_call_operand.vmem [shape: bf16[128,256], index: 10, kind: input, shape index: {}]
  %s11 = inlined_call_operand.vmem [shape: f32[1,256], index: 11, kind: input, shape index: {}]
  %s12 = inlined_call_operand.vmem [shape: bf16[256,128], index: 12, kind: input, shape index: {}]
  %s13 = inlined_call_operand.vmem [shape: f32[1,128], index: 13, kind: input, shape index: {}]
  %s14 = inlined_call_operand.vmem [shape: f32[1,128], index: 14, kind: input, shape index: {}]
  %s15 = inlined_call_operand.vmem [shape: f32[1,128], index: 15, kind: input, shape index: {}]
  %s16 = inlined_call_operand.vmem [shape: bf16[128,128], index: 16, kind: input, shape index: {}]
  %s17 = inlined_call_operand.vmem [shape: f32[1,128], index: 17, kind: input, shape index: {}]
  %s18 = inlined_call_operand.vmem [shape: bf16[128,128], index: 18, kind: input, shape index: {}]
  %s19 = inlined_call_operand.vmem [shape: f32[1,128], index: 19, kind: input, shape index: {}]
  %s20 = inlined_call_operand.vmem [shape: bf16[128,128], index: 20, kind: input, shape index: {}]
  %s21 = inlined_call_operand.vmem [shape: f32[1,128], index: 21, kind: input, shape index: {}]
  %s22 = inlined_call_operand.hbm [shape: f32[2,1,128], index: 22, kind: output, shape index: {}]
  %s23 = sld [smem:[#allocation0]]
  $region121: #{space_classifier_forward.1} parent=0
    _
  %s25 = ssub.s32 1, %s23
  %s26 = scalar_select 0, %s25, %s23
  $region1: #{space_classifier_forward.1} parent=0
    #allocation2 [shape = 'u8[1024]{0}', space=vmem, size = 0x400, scoped, tag = 'output window, operand 0']
    #allocation3 [shape = 's32[2]{0}', space=sflag, size = 0x8, scoped, tag = 'scoped memory for space_classifier_forward.1']
    %27 = vsyncpa [#allocation3], 0
    %s28 = scalar_lea.sflag [#allocation3], 1
    %29 = vsyncpa %s28, 0
    loop: start=0, step=1, limit=4
    $region2: #{space_classifier_forward.1} parent=1 // loop_pre_header
      _
    $region3: #{space_classifier_forward.1} parent=1 // loop_header
      %s31 = sphi 0, %s35
      %p32 = scmp.ge.s32.totalorder %s31, 4
      %s41 = sphi 0, %s43
      %s44 = sphi 0, %s41
      %s45 = sphi 0, %s44
      %s61 = sphi 0, %s45
      %s67 = sphi 0, %s69
      %s70 = sphi 0, %s67
      %s71 = sphi 0, %s70
      %s87 = sphi 0, %s71
      %s91 = sphi 0, %s91
      %s93 = sphi 0, %s91
      %s94 = sphi 0, %s93
      %s108 = sphi 0, %s94
      %s112 = sphi 0, %s112
      %s114 = sphi 0, %s112
      %s115 = sphi 0, %s114
      %s129 = sphi 0, %s115
      %s133 = sphi 0, %s133
      %s135 = sphi 0, %s133
      %s136 = sphi 0, %s135
      %s150 = sphi 0, %s136
      %s154 = sphi 0, %s154
      %s156 = sphi 0, %s154
      %s157 = sphi 0, %s156
      %s171 = sphi 0, %s157
      %s175 = sphi 0, %s175
      %s177 = sphi 0, %s175
      %s178 = sphi 0, %s177
      %s192 = sphi 0, %s178
      %s196 = sphi 0, %s196
      %s198 = sphi 0, %s196
      %s199 = sphi 0, %s198
      %s213 = sphi 0, %s199
      %s217 = sphi 0, %s217
      %s219 = sphi 0, %s217
      %s220 = sphi 0, %s219
      %s234 = sphi 0, %s220
      %s238 = sphi 0, %s238
      %s240 = sphi 0, %s238
      %s241 = sphi 0, %s240
      %s255 = sphi 0, %s241
      %s259 = sphi 0, %s259
      %s261 = sphi 0, %s259
      %s262 = sphi 0, %s261
      %s276 = sphi 0, %s262
      %s280 = sphi 0, %s280
      %s282 = sphi 0, %s280
      %s283 = sphi 0, %s282
      %s297 = sphi 0, %s283
      %s301 = sphi 0, %s301
      %s303 = sphi 0, %s301
      %s304 = sphi 0, %s303
      %s318 = sphi 0, %s304
      %s322 = sphi 0, %s322
      %s324 = sphi 0, %s322
      %s325 = sphi 0, %s324
      %s339 = sphi 0, %s325
      %s343 = sphi 0, %s343
      %s345 = sphi 0, %s343
      %s346 = sphi 0, %s345
      %s360 = sphi 0, %s346
      %s364 = sphi 0, %s364
      %s366 = sphi 0, %s364
      %s367 = sphi 0, %s366
      %s381 = sphi 0, %s367
      %s385 = sphi 0, %s385
      %s387 = sphi 0, %s385
      %s388 = sphi 0, %s387
      %s402 = sphi 0, %s388
      %s406 = sphi 0, %s406
      %s408 = sphi 0, %s406
      %s409 = sphi 0, %s408
      %s423 = sphi 0, %s409
      %s427 = sphi 0, %s427
      %s429 = sphi 0, %s427
      %s430 = sphi 0, %s429
      %s444 = sphi 0, %s430
      %s448 = sphi 0, %s448
      %s450 = sphi 0, %s448
      %s451 = sphi 0, %s450
      %s465 = sphi 0, %s451
      %s469 = sphi 0, %s469
      %s471 = sphi 0, %s469
      %s472 = sphi 0, %s471
      %s486 = sphi 0, %s472
      %s490 = sphi 0, %s490
      %s492 = sphi 0, %s490
      %s493 = sphi 0, %s492
      %s507 = sphi 0, %s493
      %s513 = sphi 0, %s515
      %s516 = sphi 0, %s513
      %s517 = sphi 0, %s516
      %s533 = sphi 0, %s517
    $region4: #{space_classifier_forward.1} parent=1 // loop_header_branch
      %34 = sbr.rel (%p32) target = $region8
    $region5: #{space_classifier_forward.1} parent=1 // loop_body
      %s36 = ssub.s32 %s31, 1
      %s37 = ssub.s32 %s31, 2
      %s38 = sadd.s32 %s31, 1
      %s39 = ssub.s32 %s31, %s38
      %p40 = scmp.eq.s32.totalorder %s39, 0
      %s42 = sadd.s32 %s41, 1
      %s43 = scalar_select %p40, %s41, %s42
      %p46 = pneg %p40
      %p47 = scmp.eq.s32.totalorder %s31, 1
      %p48 = por %p46, %p47
      %p49 = scmp.ne.s32.totalorder %s41, %s44
      %p50 = scmp.eq.s32.totalorder %s31, 0
      %p51 = por %p49, %p50
      %p52 = scmp.ne.s32.totalorder %s41, %s44
      %p53 = scmp.eq.s32.totalorder %s36, 1
      %p54 = por %p52, %p53
      %p55 = scmp.ne.s32.totalorder %s44, %s45
      %p56 = scmp.eq.s32.totalorder %s36, 0
      %p57 = por %p55, %p56
      %p58 = scmp.ne.s32.totalorder %s44, %s45
      %p59 = scmp.eq.s32.totalorder %s37, 1
      %p60 = por %p58, %p59
      %p62 = scmp.ne.s32.totalorder %s45, %s61
      %p63 = scmp.eq.s32.totalorder %s37, 0
      %p64 = por %p62, %p63
      %s65 = ssub.s32 %s31, %s38
      %p66 = scmp.eq.s32.totalorder %s65, 0
      %s68 = sadd.s32 %s67, 1
      %s69 = scalar_select %p66, %s67, %s68
      %p72 = pneg %p66
      %p73 = scmp.eq.s32.totalorder %s31, 1
      %p74 = por %p72, %p73
      %p75 = scmp.ne.s32.totalorder %s67, %s70
      %p76 = scmp.eq.s32.totalorder %s31, 0
      %p77 = por %p75, %p76
      %p78 = scmp.ne.s32.totalorder %s67, %s70
      %p79 = scmp.eq.s32.totalorder %s36, 1
      %p80 = por %p78, %p79
      %p81 = scmp.ne.s32.totalorder %s70, %s71
      %p82 = scmp.eq.s32.totalorder %s36, 0
      %p83 = por %p81, %p82
      %p84 = scmp.ne.s32.totalorder %s70, %s71
      %p85 = scmp.eq.s32.totalorder %s37, 1
      %p86 = por %p84, %p85
      %p88 = scmp.ne.s32.totalorder %s71, %s87
      %p89 = scmp.eq.s32.totalorder %s37, 0
      %p90 = por %p88, %p89
      %s92 = sadd.s32 %s91, 1
      %p95 = scmp.eq.s32.totalorder %s31, 1
      %p96 = scmp.ne.s32.totalorder %s91, %s93
      %p97 = scmp.eq.s32.totalorder %s31, 0
      %p98 = por %p96, %p97
      %p99 = scmp.ne.s32.totalorder %s91, %s93
      %p100 = scmp.eq.s32.totalorder %s36, 1
      %p101 = por %p99, %p100
      %p102 = scmp.ne.s32.totalorder %s93, %s94
      %p103 = scmp.eq.s32.totalorder %s36, 0
      %p104 = por %p102, %p103
      %p105 = scmp.ne.s32.totalorder %s93, %s94
      %p106 = scmp.eq.s32.totalorder %s37, 1
      %p107 = por %p105, %p106
      %p109 = scmp.ne.s32.totalorder %s94, %s108
      %p110 = scmp.eq.s32.totalorder %s37, 0
      %p111 = por %p109, %p110
      %s113 = sadd.s32 %s112, 1
      %p116 = scmp.eq.s32.totalorder %s31, 1
      %p117 = scmp.ne.s32.totalorder %s112, %s114
      %p118 = scmp.eq.s32.totalorder %s31, 0
      %p119 = por %p117, %p118
      %p120 = scmp.ne.s32.totalorder %s112, %s114
      %p121 = scmp.eq.s32.totalorder %s36, 1
      %p122 = por %p120, %p121
      %p123 = scmp.ne.s32.totalorder %s114, %s115
      %p124 = scmp.eq.s32.totalorder %s36, 0
      %p125 = por %p123, %p124
      %p126 = scmp.ne.s32.totalorder %s114, %s115
      %p127 = scmp.eq.s32.totalorder %s37, 1
      %p128 = por %p126, %p127
      %p130 = scmp.ne.s32.totalorder %s115, %s129
      %p131 = scmp.eq.s32.totalorder %s37, 0
      %p132 = por %p130, %p131
      %s134 = sadd.s32 %s133, 1
      %p137 = scmp.eq.s32.totalorder %s31, 1
      %p138 = scmp.ne.s32.totalorder %s133, %s135
      %p139 = scmp.eq.s32.totalorder %s31, 0
      %p140 = por %p138, %p139
      %p141 = scmp.ne.s32.totalorder %s133, %s135
      %p142 = scmp.eq.s32.totalorder %s36, 1
      %p143 = por %p141, %p142
      %p144 = scmp.ne.s32.totalorder %s135, %s136
      %p145 = scmp.eq.s32.totalorder %s36, 0
      %p146 = por %p144, %p145
      %p147 = scmp.ne.s32.totalorder %s135, %s136
      %p148 = scmp.eq.s32.totalorder %s37, 1
      %p149 = por %p147, %p148
      %p151 = scmp.ne.s32.totalorder %s136, %s150
      %p152 = scmp.eq.s32.totalorder %s37, 0
      %p153 = por %p151, %p152
      %s155 = sadd.s32 %s154, 1
      %p158 = scmp.eq.s32.totalorder %s31, 1
      %p159 = scmp.ne.s32.totalorder %s154, %s156
      %p160 = scmp.eq.s32.totalorder %s31, 0
      %p161 = por %p159, %p160
      %p162 = scmp.ne.s32.totalorder %s154, %s156
      %p163 = scmp.eq.s32.totalorder %s36, 1
      %p164 = por %p162, %p163
      %p165 = scmp.ne.s32.totalorder %s156, %s157
      %p166 = scmp.eq.s32.totalorder %s36, 0
      %p167 = por %p165, %p166
      %p168 = scmp.ne.s32.totalorder %s156, %s157
      %p169 = scmp.eq.s32.totalorder %s37, 1
      %p170 = por %p168, %p169
      %p172 = scmp.ne.s32.totalorder %s157, %s171
      %p173 = scmp.eq.s32.totalorder %s37, 0
      %p174 = por %p172, %p173
      %s176 = sadd.s32 %s175, 1
      %p179 = scmp.eq.s32.totalorder %s31, 1
      %p180 = scmp.ne.s32.totalorder %s175, %s177
      %p181 = scmp.eq.s32.totalorder %s31, 0
      %p182 = por %p180, %p181
      %p183 = scmp.ne.s32.totalorder %s175, %s177
      %p184 = scmp.eq.s32.totalorder %s36, 1
      %p185 = por %p183, %p184
      %p186 = scmp.ne.s32.totalorder %s177, %s178
      %p187 = scmp.eq.s32.totalorder %s36, 0
      %p188 = por %p186, %p187
      %p189 = scmp.ne.s32.totalorder %s177, %s178
      %p190 = scmp.eq.s32.totalorder %s37, 1
      %p191 = por %p189, %p190
      %p193 = scmp.ne.s32.totalorder %s178, %s192
      %p194 = scmp.eq.s32.totalorder %s37, 0
      %p195 = por %p193, %p194
      %s197 = sadd.s32 %s196, 1
      %p200 = scmp.eq.s32.totalorder %s31, 1
      %p201 = scmp.ne.s32.totalorder %s196, %s198
      %p202 = scmp.eq.s32.totalorder %s31, 0
      %p203 = por %p201, %p202
      %p204 = scmp.ne.s32.totalorder %s196, %s198
      %p205 = scmp.eq.s32.totalorder %s36, 1
      %p206 = por %p204, %p205
      %p207 = scmp.ne.s32.totalorder %s198, %s199
      %p208 = scmp.eq.s32.totalorder %s36, 0
      %p209 = por %p207, %p208
      %p210 = scmp.ne.s32.totalorder %s198, %s199
      %p211 = scmp.eq.s32.totalorder %s37, 1
      %p212 = por %p210, %p211
      %p214 = scmp.ne.s32.totalorder %s199, %s213
      %p215 = scmp.eq.s32.totalorder %s37, 0
      %p216 = por %p214, %p215
      %s218 = sadd.s32 %s217, 1
      %p221 = scmp.eq.s32.totalorder %s31, 1
      %p222 = scmp.ne.s32.totalorder %s217, %s219
      %p223 = scmp.eq.s32.totalorder %s31, 0
      %p224 = por %p222, %p223
      %p225 = scmp.ne.s32.totalorder %s217, %s219
      %p226 = scmp.eq.s32.totalorder %s36, 1
      %p227 = por %p225, %p226
      %p228 = scmp.ne.s32.totalorder %s219, %s220
      %p229 = scmp.eq.s32.totalorder %s36, 0
      %p230 = por %p228, %p229
      %p231 = scmp.ne.s32.totalorder %s219, %s220
      %p232 = scmp.eq.s32.totalorder %s37, 1
      %p233 = por %p231, %p232
      %p235 = scmp.ne.s32.totalorder %s220, %s234
      %p236 = scmp.eq.s32.totalorder %s37, 0
      %p237 = por %p235, %p236
      %s239 = sadd.s32 %s238, 1
      %p242 = scmp.eq.s32.totalorder %s31, 1
      %p243 = scmp.ne.s32.totalorder %s238, %s240
      %p244 = scmp.eq.s32.totalorder %s31, 0
      %p245 = por %p243, %p244
      %p246 = scmp.ne.s32.totalorder %s238, %s240
      %p247 = scmp.eq.s32.totalorder %s36, 1
      %p248 = por %p246, %p247
      %p249 = scmp.ne.s32.totalorder %s240, %s241
      %p250 = scmp.eq.s32.totalorder %s36, 0
      %p251 = por %p249, %p250
      %p252 = scmp.ne.s32.totalorder %s240, %s241
      %p253 = scmp.eq.s32.totalorder %s37, 1
      %p254 = por %p252, %p253
      %p256 = scmp.ne.s32.totalorder %s241, %s255
      %p257 = scmp.eq.s32.totalorder %s37, 0
      %p258 = por %p256, %p257
      %s260 = sadd.s32 %s259, 1
      %p263 = scmp.eq.s32.totalorder %s31, 1
      %p264 = scmp.ne.s32.totalorder %s259, %s261
      %p265 = scmp.eq.s32.totalorder %s31, 0
      %p266 = por %p264, %p265
      %p267 = scmp.ne.s32.totalorder %s259, %s261
      %p268 = scmp.eq.s32.totalorder %s36, 1
      %p269 = por %p267, %p268
      %p270 = scmp.ne.s32.totalorder %s261, %s262
      %p271 = scmp.eq.s32.totalorder %s36, 0
      %p272 = por %p270, %p271
      %p273 = scmp.ne.s32.totalorder %s261, %s262
      %p274 = scmp.eq.s32.totalorder %s37, 1
      %p275 = por %p273, %p274
      %p277 = scmp.ne.s32.totalorder %s262, %s276
      %p278 = scmp.eq.s32.totalorder %s37, 0
      %p279 = por %p277, %p278
      %s281 = sadd.s32 %s280, 1
      %p284 = scmp.eq.s32.totalorder %s31, 1
      %p285 = scmp.ne.s32.totalorder %s280, %s282
      %p286 = scmp.eq.s32.totalorder %s31, 0
      %p287 = por %p285, %p286
      %p288 = scmp.ne.s32.totalorder %s280, %s282
      %p289 = scmp.eq.s32.totalorder %s36, 1
      %p290 = por %p288, %p289
      %p291 = scmp.ne.s32.totalorder %s282, %s283
      %p292 = scmp.eq.s32.totalorder %s36, 0
      %p293 = por %p291, %p292
      %p294 = scmp.ne.s32.totalorder %s282, %s283
      %p295 = scmp.eq.s32.totalorder %s37, 1
      %p296 = por %p294, %p295
      %p298 = scmp.ne.s32.totalorder %s283, %s297
      %p299 = scmp.eq.s32.totalorder %s37, 0
      %p300 = por %p298, %p299
      %s302 = sadd.s32 %s301, 1
      %p305 = scmp.eq.s32.totalorder %s31, 1
      %p306 = scmp.ne.s32.totalorder %s301, %s303
      %p307 = scmp.eq.s32.totalorder %s31, 0
      %p308 = por %p306, %p307
      %p309 = scmp.ne.s32.totalorder %s301, %s303
      %p310 = scmp.eq.s32.totalorder %s36, 1
      %p311 = por %p309, %p310
      %p312 = scmp.ne.s32.totalorder %s303, %s304
      %p313 = scmp.eq.s32.totalorder %s36, 0
      %p314 = por %p312, %p313
      %p315 = scmp.ne.s32.totalorder %s303, %s304
      %p316 = scmp.eq.s32.totalorder %s37, 1
      %p317 = por %p315, %p316
      %p319 = scmp.ne.s32.totalorder %s304, %s318
      %p320 = scmp.eq.s32.totalorder %s37, 0
      %p321 = por %p319, %p320
      %s323 = sadd.s32 %s322, 1
      %p326 = scmp.eq.s32.totalorder %s31, 1
      %p327 = scmp.ne.s32.totalorder %s322, %s324
      %p328 = scmp.eq.s32.totalorder %s31, 0
      %p329 = por %p327, %p328
      %p330 = scmp.ne.s32.totalorder %s322, %s324
      %p331 = scmp.eq.s32.totalorder %s36, 1
      %p332 = por %p330, %p331
      %p333 = scmp.ne.s32.totalorder %s324, %s325
      %p334 = scmp.eq.s32.totalorder %s36, 0
      %p335 = por %p333, %p334
      %p336 = scmp.ne.s32.totalorder %s324, %s325
      %p337 = scmp.eq.s32.totalorder %s37, 1
      %p338 = por %p336, %p337
      %p340 = scmp.ne.s32.totalorder %s325, %s339
      %p341 = scmp.eq.s32.totalorder %s37, 0
      %p342 = por %p340, %p341
      %s344 = sadd.s32 %s343, 1
      %p347 = scmp.eq.s32.totalorder %s31, 1
      %p348 = scmp.ne.s32.totalorder %s343, %s345
      %p349 = scmp.eq.s32.totalorder %s31, 0
      %p350 = por %p348, %p349
      %p351 = scmp.ne.s32.totalorder %s343, %s345
      %p352 = scmp.eq.s32.totalorder %s36, 1
      %p353 = por %p351, %p352
      %p354 = scmp.ne.s32.totalorder %s345, %s346
      %p355 = scmp.eq.s32.totalorder %s36, 0
      %p356 = por %p354, %p355
      %p357 = scmp.ne.s32.totalorder %s345, %s346
      %p358 = scmp.eq.s32.totalorder %s37, 1
      %p359 = por %p357, %p358
      %p361 = scmp.ne.s32.totalorder %s346, %s360
      %p362 = scmp.eq.s32.totalorder %s37, 0
      %p363 = por %p361, %p362
      %s365 = sadd.s32 %s364, 1
      %p368 = scmp.eq.s32.totalorder %s31, 1
      %p369 = scmp.ne.s32.totalorder %s364, %s366
      %p370 = scmp.eq.s32.totalorder %s31, 0
      %p371 = por %p369, %p370
      %p372 = scmp.ne.s32.totalorder %s364, %s366
      %p373 = scmp.eq.s32.totalorder %s36, 1
      %p374 = por %p372, %p373
      %p375 = scmp.ne.s32.totalorder %s366, %s367
      %p376 = scmp.eq.s32.totalorder %s36, 0
      %p377 = por %p375, %p376
      %p378 = scmp.ne.s32.totalorder %s366, %s367
      %p379 = scmp.eq.s32.totalorder %s37, 1
      %p380 = por %p378, %p379
      %p382 = scmp.ne.s32.totalorder %s367, %s381
      %p383 = scmp.eq.s32.totalorder %s37, 0
      %p384 = por %p382, %p383
      %s386 = sadd.s32 %s385, 1
      %p389 = scmp.eq.s32.totalorder %s31, 1
      %p390 = scmp.ne.s32.totalorder %s385, %s387
      %p391 = scmp.eq.s32.totalorder %s31, 0
      %p392 = por %p390, %p391
      %p393 = scmp.ne.s32.totalorder %s385, %s387
      %p394 = scmp.eq.s32.totalorder %s36, 1
      %p395 = por %p393, %p394
      %p396 = scmp.ne.s32.totalorder %s387, %s388
      %p397 = scmp.eq.s32.totalorder %s36, 0
      %p398 = por %p396, %p397
      %p399 = scmp.ne.s32.totalorder %s387, %s388
      %p400 = scmp.eq.s32.totalorder %s37, 1
      %p401 = por %p399, %p400
      %p403 = scmp.ne.s32.totalorder %s388, %s402
      %p404 = scmp.eq.s32.totalorder %s37, 0
      %p405 = por %p403, %p404
      %s407 = sadd.s32 %s406, 1
      %p410 = scmp.eq.s32.totalorder %s31, 1
      %p411 = scmp.ne.s32.totalorder %s406, %s408
      %p412 = scmp.eq.s32.totalorder %s31, 0
      %p413 = por %p411, %p412
      %p414 = scmp.ne.s32.totalorder %s406, %s408
      %p415 = scmp.eq.s32.totalorder %s36, 1
      %p416 = por %p414, %p415
      %p417 = scmp.ne.s32.totalorder %s408, %s409
      %p418 = scmp.eq.s32.totalorder %s36, 0
      %p419 = por %p417, %p418
      %p420 = scmp.ne.s32.totalorder %s408, %s409
      %p421 = scmp.eq.s32.totalorder %s37, 1
      %p422 = por %p420, %p421
      %p424 = scmp.ne.s32.totalorder %s409, %s423
      %p425 = scmp.eq.s32.totalorder %s37, 0
      %p426 = por %p424, %p425
      %s428 = sadd.s32 %s427, 1
      %p431 = scmp.eq.s32.totalorder %s31, 1
      %p432 = scmp.ne.s32.totalorder %s427, %s429
      %p433 = scmp.eq.s32.totalorder %s31, 0
      %p434 = por %p432, %p433
      %p435 = scmp.ne.s32.totalorder %s427, %s429
      %p436 = scmp.eq.s32.totalorder %s36, 1
      %p437 = por %p435, %p436
      %p438 = scmp.ne.s32.totalorder %s429, %s430
      %p439 = scmp.eq.s32.totalorder %s36, 0
      %p440 = por %p438, %p439
      %p441 = scmp.ne.s32.totalorder %s429, %s430
      %p442 = scmp.eq.s32.totalorder %s37, 1
      %p443 = por %p441, %p442
      %p445 = scmp.ne.s32.totalorder %s430, %s444
      %p446 = scmp.eq.s32.totalorder %s37, 0
      %p447 = por %p445, %p446
      %s449 = sadd.s32 %s448, 1
      %p452 = scmp.eq.s32.totalorder %s31, 1
      %p453 = scmp.ne.s32.totalorder %s448, %s450
      %p454 = scmp.eq.s32.totalorder %s31, 0
      %p455 = por %p453, %p454
      %p456 = scmp.ne.s32.totalorder %s448, %s450
      %p457 = scmp.eq.s32.totalorder %s36, 1
      %p458 = por %p456, %p457
      %p459 = scmp.ne.s32.totalorder %s450, %s451
      %p460 = scmp.eq.s32.totalorder %s36, 0
      %p461 = por %p459, %p460
      %p462 = scmp.ne.s32.totalorder %s450, %s451
      %p463 = scmp.eq.s32.totalorder %s37, 1
      %p464 = por %p462, %p463
      %p466 = scmp.ne.s32.totalorder %s451, %s465
      %p467 = scmp.eq.s32.totalorder %s37, 0
      %p468 = por %p466, %p467
      %s470 = sadd.s32 %s469, 1
      %p473 = scmp.eq.s32.totalorder %s31, 1
      %p474 = scmp.ne.s32.totalorder %s469, %s471
      %p475 = scmp.eq.s32.totalorder %s31, 0
      %p476 = por %p474, %p475
      %p477 = scmp.ne.s32.totalorder %s469, %s471
      %p478 = scmp.eq.s32.totalorder %s36, 1
      %p479 = por %p477, %p478
      %p480 = scmp.ne.s32.totalorder %s471, %s472
      %p481 = scmp.eq.s32.totalorder %s36, 0
      %p482 = por %p480, %p481
      %p483 = scmp.ne.s32.totalorder %s471, %s472
      %p484 = scmp.eq.s32.totalorder %s37, 1
      %p485 = por %p483, %p484
      %p487 = scmp.ne.s32.totalorder %s472, %s486
      %p488 = scmp.eq.s32.totalorder %s37, 0
      %p489 = por %p487, %p488
      %s491 = sadd.s32 %s490, 1
      %p494 = scmp.eq.s32.totalorder %s31, 1
      %p495 = scmp.ne.s32.totalorder %s490, %s492
      %p496 = scmp.eq.s32.totalorder %s31, 0
      %p497 = por %p495, %p496
      %p498 = scmp.ne.s32.totalorder %s490, %s492
      %p499 = scmp.eq.s32.totalorder %s36, 1
      %p500 = por %p498, %p499
      %p501 = scmp.ne.s32.totalorder %s492, %s493
      %p502 = scmp.eq.s32.totalorder %s36, 0
      %p503 = por %p501, %p502
      %p504 = scmp.ne.s32.totalorder %s492, %s493
      %p505 = scmp.eq.s32.totalorder %s37, 1
      %p506 = por %p504, %p505
      %p508 = scmp.ne.s32.totalorder %s493, %s507
      %p509 = scmp.eq.s32.totalorder %s37, 0
      %p510 = por %p508, %p509
      %s511 = ssub.s32 %s31, %s38
      %p512 = scmp.eq.s32.totalorder %s511, 0
      %s514 = sadd.s32 %s513, 1
      %s515 = scalar_select %p512, %s513, %s514
      %p518 = pneg %p512
      %p519 = scmp.eq.s32.totalorder %s31, 1
      %p520 = por %p518, %p519
      %p521 = scmp.ne.s32.totalorder %s513, %s516
      %p522 = scmp.eq.s32.totalorder %s31, 0
      %p523 = por %p521, %p522
      %p524 = scmp.ne.s32.totalorder %s513, %s516
      %p525 = scmp.eq.s32.totalorder %s36, 1
      %p526 = por %p524, %p525
      %p527 = scmp.ne.s32.totalorder %s516, %s517
      %p528 = scmp.eq.s32.totalorder %s36, 0
      %p529 = por %p527, %p528
      %p530 = scmp.ne.s32.totalorder %s516, %s517
      %p531 = scmp.eq.s32.totalorder %s37, 1
      %p532 = por %p530, %p531
      %p534 = scmp.ne.s32.totalorder %s517, %s533
      %p535 = scmp.eq.s32.totalorder %s37, 0
      %p536 = por %p534, %p535
      %p537 = scmp.le.s32.totalorder 1, %s31
      %p538 = scmp.lt.s32.totalorder %s31, 3
      %p539 = pnand %p537, %p538
      %p540 = pneg %p539
      // Predicated region
      $region9: #{space_classifier_forward.1} parent=5 // pred_check
        _
      $region10: #{space_classifier_forward.1} parent=5 // pred_check_branch
        %542 = sbr.rel (%p539) target = $region12
      $region11: #{space_classifier_forward.1} parent=5 // pred_region
        %s543 = ssub.s32 %s31, 1
        // Predicated region
        $region13: #{space_classifier_forward.1} parent=11 // pred_check
          %p544 = pneg %p104
        $region14: #{space_classifier_forward.1} parent=11 // pred_check_branch
          %546 = sbr.rel (%p544) target = $region16
        $region15: #{space_classifier_forward.1} parent=11 // pred_region
          _
        $region16: #{space_classifier_forward.1} parent=11 // pred_fallthru
          _
        // Predicated region
        $region17: #{space_classifier_forward.1} parent=11 // pred_check
          %p547 = pneg %p125
        $region18: #{space_classifier_forward.1} parent=11 // pred_check_branch
          %549 = sbr.rel (%p547) target = $region20
        $region19: #{space_classifier_forward.1} parent=11 // pred_region
          _
        $region20: #{space_classifier_forward.1} parent=11 // pred_fallthru
          _
        // Predicated region
        $region21: #{space_classifier_forward.1} parent=11 // pred_check
          %p550 = pneg %p146
        $region22: #{space_classifier_forward.1} parent=11 // pred_check_branch
          %552 = sbr.rel (%p550) target = $region24
        $region23: #{space_classifier_forward.1} parent=11 // pred_region
          _
        $region24: #{space_classifier_forward.1} parent=11 // pred_fallthru
          _
        // Predicated region
        $region25: #{space_classifier_forward.1} parent=11 // pred_check
          %p553 = pneg %p167
        $region26: #{space_classifier_forward.1} parent=11 // pred_check_branch
          %555 = sbr.rel (%p553) target = $region28
        $region27: #{space_classifier_forward.1} parent=11 // pred_region
          _
        $region28: #{space_classifier_forward.1} parent=11 // pred_fallthru
          _
        // Predicated region
        $region29: #{space_classifier_forward.1} parent=11 // pred_check
          %p556 = pneg %p188
        $region30: #{space_classifier_forward.1} parent=11 // pred_check_branch
          %558 = sbr.rel (%p556) target = $region32
        $region31: #{space_classifier_forward.1} parent=11 // pred_region
          _
        $region32: #{space_classifier_forward.1} parent=11 // pred_fallthru
          _
        // Predicated region
        $region33: #{space_classifier_forward.1} parent=11 // pred_check
          %p559 = pneg %p209
        $region34: #{space_classifier_forward.1} parent=11 // pred_check_branch
          %561 = sbr.rel (%p559) target = $region36
        $region35: #{space_classifier_forward.1} parent=11 // pred_region
          _
        $region36: #{space_classifier_forward.1} parent=11 // pred_fallthru
          _
        // Predicated region
        $region37: #{space_classifier_forward.1} parent=11 // pred_check
          %p562 = pneg %p230
        $region38: #{space_classifier_forward.1} parent=11 // pred_check_branch
          %564 = sbr.rel (%p562) target = $region40
        $region39: #{space_classifier_forward.1} parent=11 // pred_region
          _
        $region40: #{space_classifier_forward.1} parent=11 // pred_fallthru
          _
        // Predicated region
        $region41: #{space_classifier_forward.1} parent=11 // pred_check
          %p565 = pneg %p251
        $region42: #{space_classifier_forward.1} parent=11 // pred_check_branch
          %567 = sbr.rel (%p565) target = $region44
        $region43: #{space_classifier_forward.1} parent=11 // pred_region
          _
        $region44: #{space_classifier_forward.1} parent=11 // pred_fallthru
          _
        // Predicated region
        $region45: #{space_classifier_forward.1} parent=11 // pred_check
          %p568 = pneg %p272
        $region46: #{space_classifier_forward.1} parent=11 // pred_check_branch
          %570 = sbr.rel (%p568) target = $region48
        $region47: #{space_classifier_forward.1} parent=11 // pred_region
          _
        $region48: #{space_classifier_forward.1} parent=11 // pred_fallthru
          _
        // Predicated region
        $region49: #{space_classifier_forward.1} parent=11 // pred_check
          %p571 = pneg %p293
        $region50: #{space_classifier_forward.1} parent=11 // pred_check_branch
          %573 = sbr.rel (%p571) target = $region52
        $region51: #{space_classifier_forward.1} parent=11 // pred_region
          _
        $region52: #{space_classifier_forward.1} parent=11 // pred_fallthru
          _
        // Predicated region
        $region53: #{space_classifier_forward.1} parent=11 // pred_check
          %p574 = pneg %p314
        $region54: #{space_classifier_forward.1} parent=11 // pred_check_branch
          %576 = sbr.rel (%p574) target = $region56
        $region55: #{space_classifier_forward.1} parent=11 // pred_region
          _
        $region56: #{space_classifier_forward.1} parent=11 // pred_fallthru
          _
        // Predicated region
        $region57: #{space_classifier_forward.1} parent=11 // pred_check
          %p577 = pneg %p335
        $region58: #{space_classifier_forward.1} parent=11 // pred_check_branch
          %579 = sbr.rel (%p577) target = $region60
        $region59: #{space_classifier_forward.1} parent=11 // pred_region
          _
        $region60: #{space_classifier_forward.1} parent=11 // pred_fallthru
          _
        // Predicated region
        $region61: #{space_classifier_forward.1} parent=11 // pred_check
          %p580 = pneg %p356
        $region62: #{space_classifier_forward.1} parent=11 // pred_check_branch
          %582 = sbr.rel (%p580) target = $region64
        $region63: #{space_classifier_forward.1} parent=11 // pred_region
          _
        $region64: #{space_classifier_forward.1} parent=11 // pred_fallthru
          _
        // Predicated region
        $region65: #{space_classifier_forward.1} parent=11 // pred_check
          %p583 = pneg %p377
        $region66: #{space_classifier_forward.1} parent=11 // pred_check_branch
          %585 = sbr.rel (%p583) target = $region68
        $region67: #{space_classifier_forward.1} parent=11 // pred_region
          _
        $region68: #{space_classifier_forward.1} parent=11 // pred_fallthru
          _
        // Predicated region
        $region69: #{space_classifier_forward.1} parent=11 // pred_check
          %p586 = pneg %p398
        $region70: #{space_classifier_forward.1} parent=11 // pred_check_branch
          %588 = sbr.rel (%p586) target = $region72
        $region71: #{space_classifier_forward.1} parent=11 // pred_region
          _
        $region72: #{space_classifier_forward.1} parent=11 // pred_fallthru
          _
        // Predicated region
        $region73: #{space_classifier_forward.1} parent=11 // pred_check
          %p589 = pneg %p419
        $region74: #{space_classifier_forward.1} parent=11 // pred_check_branch
          %591 = sbr.rel (%p589) target = $region76
        $region75: #{space_classifier_forward.1} parent=11 // pred_region
          _
        $region76: #{space_classifier_forward.1} parent=11 // pred_fallthru
          _
        // Predicated region
        $region77: #{space_classifier_forward.1} parent=11 // pred_check
          %p592 = pneg %p440
        $region78: #{space_classifier_forward.1} parent=11 // pred_check_branch
          %594 = sbr.rel (%p592) target = $region80
        $region79: #{space_classifier_forward.1} parent=11 // pred_region
          _
        $region80: #{space_classifier_forward.1} parent=11 // pred_fallthru
          _
        // Predicated region
        $region81: #{space_classifier_forward.1} parent=11 // pred_check
          %p595 = pneg %p461
        $region82: #{space_classifier_forward.1} parent=11 // pred_check_branch
          %597 = sbr.rel (%p595) target = $region84
        $region83: #{space_classifier_forward.1} parent=11 // pred_region
          _
        $region84: #{space_classifier_forward.1} parent=11 // pred_fallthru
          _
        // Predicated region
        $region85: #{space_classifier_forward.1} parent=11 // pred_check
          %p598 = pneg %p482
        $region86: #{space_classifier_forward.1} parent=11 // pred_check_branch
          %600 = sbr.rel (%p598) target = $region88
        $region87: #{space_classifier_forward.1} parent=11 // pred_region
          _
        $region88: #{space_classifier_forward.1} parent=11 // pred_fallthru
          _
        // Predicated region
        $region89: #{space_classifier_forward.1} parent=11 // pred_check
          %p601 = pneg %p503
        $region90: #{space_classifier_forward.1} parent=11 // pred_check_branch
          %603 = sbr.rel (%p601) target = $region92
        $region91: #{space_classifier_forward.1} parent=11 // pred_region
          _
        $region92: #{space_classifier_forward.1} parent=11 // pred_fallthru
          _
      $region12: #{space_classifier_forward.1} parent=5 // pred_fallthru
        _
      %p604 = scmp.lt.s32.totalorder %s31, 2
      // Predicated region
      $region93: #{space_classifier_forward.1} parent=5 // pred_check
        %p605 = pneg %p604
      $region94: #{space_classifier_forward.1} parent=5 // pred_check_branch
        %607 = sbr.rel (%p605) target = $region96
      $region95: #{space_classifier_forward.1} parent=5 // pred_region
        // Predicated region
        $region97: #{space_classifier_forward.1} parent=95 // pred_check
          %p608 = pneg %p51
        $region98: #{space_classifier_forward.1} parent=95 // pred_check_branch
          %610 = sbr.rel (%p608) target = $region100
        $region99: #{space_classifier_forward.1} parent=95 // pred_region
          %p611 = scmp.lt.s32.totalorder %s31, 1
          %s612 = scalar_select %p611, %s31, 1
          %s613 = smul.addr %s612, 2
          %s614 = smul.addr %s613, 8
          %s615 = scalar_lea.vmem %s0, %s614
        $region100: #{space_classifier_forward.1} parent=95 // pred_fallthru
          _
        // Predicated region
        $region101: #{space_classifier_forward.1} parent=95 // pred_check
          %p616 = pneg %p77
        $region102: #{space_classifier_forward.1} parent=95 // pred_check_branch
          %618 = sbr.rel (%p616) target = $region104
        $region103: #{space_classifier_forward.1} parent=95 // pred_region
          %p619 = scmp.lt.s32.totalorder %s31, 1
          %s620 = scalar_select %p619, %s31, 1
          %s621 = scalar_lea.vmem %s1, %s620
        $region104: #{space_classifier_forward.1} parent=95 // pred_fallthru
          _
      $region96: #{space_classifier_forward.1} parent=5 // pred_fallthru
        _
      %p622 = scmp.le.s32.totalorder 1, %s31
      %p623 = scmp.lt.s32.totalorder %s31, 3
      %p624 = pnand %p622, %p623
      %p625 = pneg %p624
      // Predicated region
      $region105: #{space_classifier_forward.1} parent=5 // pred_check
        _
      $region106: #{space_classifier_forward.1} parent=5 // pred_check_branch
        %627 = sbr.rel (%p624) target = $region108
      $region107: #{space_classifier_forward.1} parent=5 // pred_region
        %s628 = ssub.s32 %s31, 1
        %p629 = scmp.lt.s32.totalorder %s36, 1
        %s630 = scalar_select %p629, %s36, 1
        %s631 = smul.addr %s630, 2
        %s632 = smul.addr %s631, 8
        %s633 = scalar_lea.vmem %s0, %s632
        %p634 = pneg %p57
        %p635 = pneg %p54
        %p636 = scmp.lt.s32.totalorder %s36, 1
        %s637 = scalar_select %p636, %s36, 1
        %s638 = scalar_lea.vmem %s1, %s637
        %p639 = pneg %p83
        %p640 = pneg %p80
        %p641 = pneg %p104
        %p642 = pneg %p101
        %p643 = pneg %p125
        %p644 = pneg %p122
        %p645 = pneg %p146
        %p646 = pneg %p143
        %p647 = pneg %p167
        %p648 = pneg %p164
        %p649 = pneg %p188
        %p650 = pneg %p185
        %p651 = pneg %p209
        %p652 = pneg %p206
        %p653 = pneg %p230
        %p654 = pneg %p227
        %p655 = pneg %p251
        %p656 = pneg %p248
        %p657 = pneg %p272
        %p658 = pneg %p269
        %p659 = pneg %p293
        %p660 = pneg %p290
        %p661 = pneg %p314
        %p662 = pneg %p311
        %p663 = pneg %p335
        %p664 = pneg %p332
        %p665 = pneg %p356
        %p666 = pneg %p353
        %p667 = pneg %p377
        %p668 = pneg %p374
        %p669 = pneg %p398
        %p670 = pneg %p395
        %p671 = pneg %p419
        %p672 = pneg %p416
        %p673 = pneg %p440
        %p674 = pneg %p437
        %p675 = pneg %p461
        %p676 = pneg %p458
        %p677 = pneg %p482
        %p678 = pneg %p479
        %p679 = pneg %p503
        %p680 = pneg %p500
        %p681 = pneg %p529
        %p682 = pneg %p526
        %s683 = sand.u32 %s516, 1
        %s684 = scalar_lea.sflag [#allocation3], %s683
        %s685 = sand.u32 %s516, 1
        %s686 = scalar_lea.vmem [#allocation2], %s685
        %p687 = scmp.lt.s32.totalorder %s36, 1
        %s688 = scalar_select %p687, %s36, 1
        %s689 = smul.addr %s688, 2
        %s690 = smul.addr %s689, 8
        %s691 = scalar_lea.vmem %s0, %s690
        %p692 = scmp.lt.s32.totalorder %s36, 1
        %s693 = scalar_select %p692, %s36, 1
        %s694 = scalar_lea.vmem %s1, %s693
        %v696 = vld [vmem:[%s691] sm:$0xff]
        %v697 = vld [vmem:[%s691 + $0x8] sm:$0xff]
        %698 = vadd.xlane.f32.xlu0 %v696
        %v699 = vpop.xlane.xlu0 %698
        %700 = vadd.xlane.f32.xlu0 %v697
        %v701 = vpop.xlane.xlu0 %700
        %v702 = vrcp.pop 128.0
        %v703 = vmul.f32 128.0, %v702
        %v704 = vsub.f32 1.0, %v703
        %v705 = vmul.f32 %v702, %v704
        %v706 = vadd.f32 %v702, %v705
        %vm707 = vweird.f32 %v702
        %v708 = vsel %vm707, %v702, %v706
        %v709 = vmul.f32 %v699, %v708
        %v710 = vmul.f32 %v701, %v708
        %v711 = vsub.f32 %v696, %v709
        %v712 = vsub.f32 %v697, %v710
        %v713 = vmul.f32 %v711, %v711
        %v714 = vmul.f32 %v712, %v712
        %715 = vadd.xlane.f32.xlu0 %v713
        %v716 = vpop.xlane.xlu0 %715
        %717 = vadd.xlane.f32.xlu0 %v714
        %v718 = vpop.xlane.xlu0 %717
        %v719 = vmul.f32 %v716, %v708
        %v720 = vmul.f32 %v718, %v708
        %v721 = vadd.f32 %v719, 1e-12
        %v722 = vadd.f32 %v720, 1e-12
        %v723 = vrsqrt.pop %v721
        %v724 = vmul.f32 %v723, %v721
        %v725 = vmul.f32 %v724, %v723
        %v726 = vmul.f32 0.5, %v725
        %v727 = vsub.f32 1.5, %v726
        %v728 = vmul.f32 %v723, %v727
        %vm729 = vweird.f32 %v721
        %vm730 = vweird.f32 %v723
        %vm731 = vmor %vm729, %vm730
        %v732 = vsel %vm731, %v723, %v728
        %v733 = vrsqrt.pop %v722
        %v734 = vmul.f32 %v733, %v722
        %v735 = vmul.f32 %v734, %v733
        %v736 = vmul.f32 0.5, %v735
        %v737 = vsub.f32 1.5, %v736
        %v738 = vmul.f32 %v733, %v737
        %vm739 = vweird.f32 %v722
        %vm740 = vweird.f32 %v733
        %vm741 = vmor %vm739, %vm740
        %v742 = vsel %vm741, %v733, %v738
        %v743 = vmul.f32 %v711, %v732
        %v744 = vmul.f32 %v712, %v742
        %v745 = vld [vmem:[%s2] sm:$0x1]
        %v747 = vperm.slane %v745, 0
        %v749 = vmul.f32 %v743, %v747
        %v750 = vmul.f32 %v744, %v747
        %v751 = vld [vmem:[%s3] sm:$0x1]
        %v753 = vperm.slane %v751, 0
        %v755 = vadd.f32 %v749, %v753
        %v756 = vadd.f32 %v750, %v753
        %v757 = vpack.c.bf16 %v756, %v755
        %v758 = vld [vmem:[%s4] sm:$0xff]
        %v759 = vld [vmem:[%s4 + $0x8] sm:$0xf]
        %v760 = vld [vmem:[%s4 + $0xc] sm:$0xff]
        %v761 = vld [vmem:[%s4 + $0x14] sm:$0xf]
        %v762 = vld [vmem:[%s4 + $0x18] sm:$0xff]
        %v763 = vld [vmem:[%s4 + $0x20] sm:$0xf]
        %v764 = vld [vmem:[%s4 + $0x24] sm:$0xff]
        %v765 = vld [vmem:[%s4 + $0x2c] sm:$0xf]
        %v766 = vld [vmem:[%s4 + $0x30] sm:$0xff]
        %v767 = vld [vmem:[%s4 + $0x38] sm:$0xf]
        %v768 = vld [vmem:[%s4 + $0x3c] sm:$0xff]
        %v769 = vld [vmem:[%s4 + $0x44] sm:$0xf]
        %v770 = vld [vmem:[%s4 + $0x48] sm:$0xff]
        %v771 = vld [vmem:[%s4 + $0x50] sm:$0xf]
        %v772 = vld [vmem:[%s4 + $0x54] sm:$0xff]
        %v773 = vld [vmem:[%s4 + $0x5c] sm:$0xf]
        %v774 = vld [vmem:[%s4 + $0x60] sm:$0xff]
        %v775 = vld [vmem:[%s4 + $0x68] sm:$0xf]
        %v776 = vld [vmem:[%s4 + $0x6c] sm:$0xff]
        %v777 = vld [vmem:[%s4 + $0x74] sm:$0xf]
        %v778 = vld [vmem:[%s4 + $0x78] sm:$0xff]
        %v779 = vld [vmem:[%s4 + $0x80] sm:$0xf]
        %v780 = vld [vmem:[%s4 + $0x84] sm:$0xff]
        %v781 = vld [vmem:[%s4 + $0x8c] sm:$0xf]
        %v782 = vld [vmem:[%s4 + $0x90] sm:$0xff]
        %v783 = vld [vmem:[%s4 + $0x98] sm:$0xf]
        %v784 = vld [vmem:[%s4 + $0x9c] sm:$0xff]
        %v785 = vld [vmem:[%s4 + $0xa4] sm:$0xf]
        %v786 = vld [vmem:[%s4 + $0xa8] sm:$0xff]
        %v787 = vld [vmem:[%s4 + $0xb0] sm:$0xf]
        %v788 = vld [vmem:[%s4 + $0xb4] sm:$0xff]
        %v789 = vld [vmem:[%s4 + $0xbc] sm:$0xf]
        %v790 = vld [vmem:[%s5] sm:$0x7]
        %v792 = vperm.slane %v790, 0
        %v793 = vperm.slane %v790, 1
        %v794 = vperm.slane %v790, 2
        %v830 = vunpack.c.l.b16 %v758
        %v831 = vunpack.c.h.b16 %v758
        %v832 = vunpack.c.l.b16 %v759
        %v833 = vunpack.c.l.b16 %v760
        %v834 = vunpack.c.h.b16 %v760
        %v835 = vunpack.c.l.b16 %v761
        %v836 = vunpack.c.l.b16 %v762
        %v837 = vunpack.c.h.b16 %v762
        %v838 = vunpack.c.l.b16 %v763
        %v839 = vunpack.c.l.b16 %v764
        %v840 = vunpack.c.h.b16 %v764
        %v841 = vunpack.c.l.b16 %v765
        %v842 = vunpack.c.l.b16 %v766
        %v843 = vunpack.c.h.b16 %v766
        %v844 = vunpack.c.l.b16 %v767
        %v845 = vunpack.c.l.b16 %v768
        %v846 = vunpack.c.h.b16 %v768
        %v847 = vunpack.c.l.b16 %v769
        %v848 = vunpack.c.l.b16 %v770
        %v849 = vunpack.c.h.b16 %v770
        %v850 = vunpack.c.l.b16 %v771
        %v851 = vunpack.c.l.b16 %v772
        %v852 = vunpack.c.h.b16 %v772
        %v853 = vunpack.c.l.b16 %v773
        %v854 = vunpack.c.l.b16 %v774
        %v855 = vunpack.c.h.b16 %v774
        %v856 = vunpack.c.l.b16 %v775
        %v857 = vunpack.c.l.b16 %v776
        %v858 = vunpack.c.h.b16 %v776
        %v859 = vunpack.c.l.b16 %v777
        %v860 = vunpack.c.l.b16 %v778
        %v861 = vunpack.c.h.b16 %v778
        %v862 = vunpack.c.l.b16 %v779
        %v863 = vunpack.c.l.b16 %v780
        %v864 = vunpack.c.h.b16 %v780
        %v865 = vunpack.c.l.b16 %v781
        %v866 = vunpack.c.l.b16 %v782
        %v867 = vunpack.c.h.b16 %v782
        %v868 = vunpack.c.l.b16 %v783
        %v869 = vunpack.c.l.b16 %v784
        %v870 = vunpack.c.h.b16 %v784
        %v871 = vunpack.c.l.b16 %v785
        %v872 = vunpack.c.l.b16 %v786
        %v873 = vunpack.c.h.b16 %v786
        %v874 = vunpack.c.l.b16 %v787
        %v875 = vunpack.c.l.b16 %v788
        %v876 = vunpack.c.h.b16 %v788
        %v877 = vunpack.c.l.b16 %v789
        %v878 = vpack.c.b16 %v833, %v830
        %v879 = vpack.c.b16 %v834, %v831
        %v880 = vpack.c.b16 %v835, %v832
        %v881 = vpack.c.b16 %v839, %v836
        %v882 = vpack.c.b16 %v840, %v837
        %v883 = vpack.c.b16 %v841, %v838
        %v884 = vpack.c.b16 %v845, %v842
        %v885 = vpack.c.b16 %v846, %v843
        %v886 = vpack.c.b16 %v847, %v844
        %v887 = vpack.c.b16 %v851, %v848
        %v888 = vpack.c.b16 %v852, %v849
        %v889 = vpack.c.b16 %v853, %v850
        %v890 = vpack.c.b16 %v857, %v854
        %v891 = vpack.c.b16 %v858, %v855
        %v892 = vpack.c.b16 %v859, %v856
        %v893 = vpack.c.b16 %v863, %v860
        %v894 = vpack.c.b16 %v864, %v861
        %v895 = vpack.c.b16 %v865, %v862
        %v896 = vpack.c.b16 %v869, %v866
        %v897 = vpack.c.b16 %v870, %v867
        %v898 = vpack.c.b16 %v871, %v868
        %v899 = vpack.c.b16 %v875, %v872
        %v900 = vpack.c.b16 %v876, %v873
        %v901 = vpack.c.b16 %v877, %v874
        %926 = vmatpush.bf16.msra.mxu0 %v899
        %927 = vmatpush.bf16.msra.mxu0 %v896
        %928 = vmatpush.bf16.msra.mxu0 %v893
        %929 = vmatpush.bf16.msra.mxu0 %v890
        %930 = vmatpush.bf16.msra.mxu0 %v887
        %931 = vmatpush.bf16.msra.mxu0 %v884
        %932 = vmatpush.bf16.msra.mxu0 %v881
        %933 = vmatpush.bf16.msra.mxu0 %v878
        %934 = vmatmul.bf16.gmra.mxu0 %v757
        %v935 = vpop.f32.mrf.mxu0
        %v936 = vadd.f32 %v792, %v935
        %v937 = vpop.f32.mrf.mxu0
        %v938 = vadd.f32 %v792, %v937
        %939 = vdwg.mxu0
        %940 = vmatpush.bf16.msra.mxu0 %v900
        %941 = vmatpush.bf16.msra.mxu0 %v897
        %942 = vmatpush.bf16.msra.mxu0 %v894
        %943 = vmatpush.bf16.msra.mxu0 %v891
        %944 = vmatpush.bf16.msra.mxu0 %v888
        %945 = vmatpush.bf16.msra.mxu0 %v885
        %946 = vmatpush.bf16.msra.mxu0 %v882
        %947 = vmatpush.bf16.msra.mxu0 %v879
        %948 = vmatmul.bf16.gmra.mxu0 %v757
        %v949 = vpop.f32.mrf.mxu0
        %v950 = vadd.f32 %v793, %v949
        %v951 = vpop.f32.mrf.mxu0
        %v952 = vadd.f32 %v793, %v951
        %953 = vdwg.mxu0
        %954 = vmatpush.bf16.msra.mxu0 %v901
        %955 = vmatpush.bf16.msra.mxu0 %v898
        %956 = vmatpush.bf16.msra.mxu0 %v895
        %957 = vmatpush.bf16.msra.mxu0 %v892
        %958 = vmatpush.bf16.msra.mxu0 %v889
        %959 = vmatpush.bf16.msra.mxu0 %v886
        %960 = vmatpush.bf16.msra.mxu0 %v883
        %961 = vmatpush.bf16.msra.mxu0 %v880
        %962 = vmatmul.bf16.gmra.mxu0 %v757
        %v963 = vpop.f32.mrf.mxu0
        %v964 = vadd.f32 %v794, %v963
        %v965 = vpop.f32.mrf.mxu0
        %v966 = vadd.f32 %v794, %v965
        %967 = vdwg.mxu0
        %v968 = vpack.c.bf16 %v950, %v936
        %v969 = vpack.c.bf16 %v964, %v964
        %v970 = vpack.c.bf16 %v952, %v938
        %v971 = vpack.c.bf16 %v966, %v966
        %v974 = vunpack.c.l.b16 %v968
        %v975 = vunpack.c.l.b16 %v970
        %v976 = vpack.c.b16 %v975, %v974
        %v978 = vunpack.c.h.b16 %v968
        %v979 = vunpack.c.h.b16 %v970
        %v980 = vpack.c.b16 %v979, %v978
        %982 = vmatpush.bf16.xpose.msra.mxu0 0
        %983 = vmatpush.bf16.xpose.msra.mxu0 0
        %984 = vmatpush.bf16.xpose.msra.mxu0 0
        %985 = vmatpush.bf16.xpose.msra.mxu0 0
        %986 = vmatpush.bf16.xpose.msra.mxu0 0
        %987 = vmatpush.bf16.xpose.msra.mxu0 0
        %988 = vmatpush.bf16.xpose.msra.mxu0 0
        %989 = vmatpush.bf16.xpose.msra.mxu0 %v980
        %990 = vmatmul.bf16.gmra.mxu0 %v976
        %v991 = vpop.f32.mrf.mxu0
        %v992 = vadd.f32 0.0, %v991
        %v993 = vpop.f32.mrf.mxu0
        %v994 = vadd.f32 0.0, %v993
        %995 = vdwg.mxu0
        %v996 = vmul.f32 %v992, 0.088388346
        %v997 = vmul.f32 %v994, 0.088388346
        %v998 = vld [vmem:[%s694] sm:$0x1]
        %v1000 = vperm.slane %v998, 0
        %v1002 = vadd.f32 %v996, %v1000
        %v1003 = vadd.f32 %v997, %v1000
        %vm1004 = vcmask 130048
        %v1005 = vsel %vm1004, %v1002, -inf
        %1006 = vmax.xlane.f32.xlu0 %v1005
        %v1007 = vpop.xlane.xlu0 %1006
        %v1008 = vsel %vm1004, %v1003, -inf
        %1009 = vmax.xlane.f32.xlu0 %v1008
        %v1010 = vpop.xlane.xlu0 %1009
        %v1011 = vsub.f32 %v1002, %v1007
        %v1012 = vsub.f32 %v1003, %v1010
        %v1013 = vmul.f32 %v1011, 1.442695
        %v1014 = vpow.pop %v1013
        %v1015 = vmul.f32 %v1012, 1.442695
        %v1016 = vpow.pop %v1015
        %v1017 = vsel %vm1004, %v1014, 0.0
        %1018 = vadd.xlane.f32.xlu0 %v1017
        %v1019 = vpop.xlane.xlu0 %1018
        %v1020 = vsel %vm1004, %v1016, 0.0
        %1021 = vadd.xlane.f32.xlu0 %v1020
        %v1022 = vpop.xlane.xlu0 %1021
        %v1023 = vrcp.pop %v1019
        %v1024 = vrcp.pop %v1022
        %v1025 = vmul.f32 %v1014, %v1023
        %v1026 = vmul.f32 %v1016, %v1024
        %v1027 = vpack.c.bf16 %v1026, %v1025
        %v1030 = vunpack.c.l.b16 %v969
        %v1031 = vunpack.c.l.b16 %v971
        %v1032 = vpack.c.b16 %v1031, %v1030
        %v1035 = vsel %vm1004, %v1027, 0
        %1037 = vmatpush.bf16.msra.mxu0 0
        %1038 = vmatpush.bf16.msra.mxu0 0
        %1039 = vmatpush.bf16.msra.mxu0 0
        %1040 = vmatpush.bf16.msra.mxu0 0
        %1041 = vmatpush.bf16.msra.mxu0 0
        %1042 = vmatpush.bf16.msra.mxu0 0
        %1043 = vmatpush.bf16.msra.mxu0 0
        %1044 = vmatpush.bf16.msra.mxu0 %v1032
        %1045 = vmatmul.bf16.gmra.mxu0 %v1035
        %v1046 = vpop.f32.mrf.mxu0
        %v1047 = vadd.f32 0.0, %v1046
        %v1048 = vpop.f32.mrf.mxu0
        %v1049 = vadd.f32 0.0, %v1048
        %1050 = vdwg.mxu0
        %v1051 = vpack.c.bf16 %v1049, %v1047
        %v1052 = vld [vmem:[%s6] sm:$0xf]
        %v1053 = vld [vmem:[%s6 + $0x4] sm:$0xf]
        %v1054 = vld [vmem:[%s6 + $0x8] sm:$0xf]
        %v1055 = vld [vmem:[%s6 + $0xc] sm:$0xf]
        %v1056 = vld [vmem:[%s6 + $0x10] sm:$0xf]
        %v1057 = vld [vmem:[%s6 + $0x14] sm:$0xf]
        %v1058 = vld [vmem:[%s6 + $0x18] sm:$0xf]
        %v1059 = vld [vmem:[%s6 + $0x1c] sm:$0xf]
        %v1060 = vld [vmem:[%s6 + $0x20] sm:$0xf]
        %v1061 = vld [vmem:[%s6 + $0x24] sm:$0xf]
        %v1062 = vld [vmem:[%s6 + $0x28] sm:$0xf]
        %v1063 = vld [vmem:[%s6 + $0x2c] sm:$0xf]
        %v1064 = vld [vmem:[%s6 + $0x30] sm:$0xf]
        %v1065 = vld [vmem:[%s6 + $0x34] sm:$0xf]
        %v1066 = vld [vmem:[%s6 + $0x38] sm:$0xf]
        %v1067 = vld [vmem:[%s6 + $0x3c] sm:$0xf]
        %v1084 = vunpack.c.l.b16 %v1052
        %v1085 = vunpack.c.l.b16 %v1053
        %v1086 = vunpack.c.l.b16 %v1054
        %v1087 = vunpack.c.l.b16 %v1055
        %v1088 = vunpack.c.l.b16 %v1056
        %v1089 = vunpack.c.l.b16 %v1057
        %v1090 = vunpack.c.l.b16 %v1058
        %v1091 = vunpack.c.l.b16 %v1059
        %v1092 = vunpack.c.l.b16 %v1060
        %v1093 = vunpack.c.l.b16 %v1061
        %v1094 = vunpack.c.l.b16 %v1062
        %v1095 = vunpack.c.l.b16 %v1063
        %v1096 = vunpack.c.l.b16 %v1064
        %v1097 = vunpack.c.l.b16 %v1065
        %v1098 = vunpack.c.l.b16 %v1066
        %v1099 = vunpack.c.l.b16 %v1067
        %v1100 = vpack.c.b16 %v1085, %v1084
        %v1101 = vpack.c.b16 %v1087, %v1086
        %v1102 = vpack.c.b16 %v1089, %v1088
        %v1103 = vpack.c.b16 %v1091, %v1090
        %v1104 = vpack.c.b16 %v1093, %v1092
        %v1105 = vpack.c.b16 %v1095, %v1094
        %v1106 = vpack.c.b16 %v1097, %v1096
        %v1107 = vpack.c.b16 %v1099, %v1098
        %1116 = vmatpush.bf16.msra.mxu0 %v1107
        %1117 = vmatpush.bf16.msra.mxu0 %v1106
        %1118 = vmatpush.bf16.msra.mxu0 %v1105
        %1119 = vmatpush.bf16.msra.mxu0 %v1104
        %1120 = vmatpush.bf16.msra.mxu0 %v1103
        %1121 = vmatpush.bf16.msra.mxu0 %v1102
        %1122 = vmatpush.bf16.msra.mxu0 %v1101
        %1123 = vmatpush.bf16.msra.mxu0 %v1100
        %1124 = vmatmul.bf16.gmra.mxu0 %v1051
        %v1125 = vpop.f32.mrf.mxu0
        %v1126 = vadd.f32 0.0, %v1125
        %v1127 = vpop.f32.mrf.mxu0
        %v1128 = vadd.f32 0.0, %v1127
        %1129 = vdwg.mxu0
        %v1130 = vadd.f32 %v755, %v1126
        %v1131 = vadd.f32 %v756, %v1128
        %v1132 = vld [vmem:[%s7] sm:$0x1]
        %v1134 = vperm.slane %v1132, 0
        %v1136 = vadd.f32 %v1130, %v1134
        %v1137 = vadd.f32 %v1131, %v1134
        %1138 = vadd.xlane.f32.xlu0 %v1136
        %v1139 = vpop.xlane.xlu0 %1138
        %1140 = vadd.xlane.f32.xlu0 %v1137
        %v1141 = vpop.xlane.xlu0 %1140
        %v1142 = vmul.f32 %v1139, %v708
        %v1143 = vmul.f32 %v1141, %v708
        %v1144 = vsub.f32 %v1136, %v1142
        %v1145 = vsub.f32 %v1137, %v1143
        %v1146 = vmul.f32 %v1144, %v1144
        %v1147 = vmul.f32 %v1145, %v1145
        %1148 = vadd.xlane.f32.xlu0 %v1146
        %v1149 = vpop.xlane.xlu0 %1148
        %1150 = vadd.xlane.f32.xlu0 %v1147
        %v1151 = vpop.xlane.xlu0 %1150
        %v1152 = vmul.f32 %v1149, %v708
        %v1153 = vmul.f32 %v1151, %v708
        %v1154 = vadd.f32 %v1152, 1e-12
        %v1155 = vadd.f32 %v1153, 1e-12
        %v1156 = vrsqrt.pop %v1154
        %v1157 = vmul.f32 %v1156, %v1154
        %v1158 = vmul.f32 %v1157, %v1156
        %v1159 = vmul.f32 0.5, %v1158
        %v1160 = vsub.f32 1.5, %v1159
        %v1161 = vmul.f32 %v1156, %v1160
        %vm1162 = vweird.f32 %v1154
        %vm1163 = vweird.f32 %v1156
        %vm1164 = vmor %vm1162, %vm1163
        %v1165 = vsel %vm1164, %v1156, %v1161
        %v1166 = vrsqrt.pop %v1155
        %v1167 = vmul.f32 %v1166, %v1155
        %v1168 = vmul.f32 %v1167, %v1166
        %v1169 = vmul.f32 0.5, %v1168
        %v1170 = vsub.f32 1.5, %v1169
        %v1171 = vmul.f32 %v1166, %v1170
        %vm1172 = vweird.f32 %v1155
        %vm1173 = vweird.f32 %v1166
        %vm1174 = vmor %vm1172, %vm1173
        %v1175 = vsel %vm1174, %v1166, %v1171
        %v1176 = vmul.f32 %v1144, %v1165
        %v1177 = vmul.f32 %v1145, %v1175
        %v1178 = vld [vmem:[%s8] sm:$0x1]
        %v1180 = vperm.slane %v1178, 0
        %v1182 = vmul.f32 %v1176, %v1180
        %v1183 = vmul.f32 %v1177, %v1180
        %v1184 = vld [vmem:[%s9] sm:$0x1]
        %v1186 = vperm.slane %v1184, 0
        %v1188 = vadd.f32 %v1182, %v1186
        %v1189 = vadd.f32 %v1183, %v1186
        %v1190 = vpack.c.bf16 %v1189, %v1188
        %v1191 = vld [vmem:[%s10] sm:$0xff]
        %v1192 = vld [vmem:[%s10 + $0x8] sm:$0xff]
        %v1193 = vld [vmem:[%s10 + $0x10] sm:$0xff]
        %v1194 = vld [vmem:[%s10 + $0x18] sm:$0xff]
        %v1195 = vld [vmem:[%s10 + $0x20] sm:$0xff]
        %v1196 = vld [vmem:[%s10 + $0x28] sm:$0xff]
        %v1197 = vld [vmem:[%s10 + $0x30] sm:$0xff]
        %v1198 = vld [vmem:[%s10 + $0x38] sm:$0xff]
        %v1199 = vld [vmem:[%s10 + $0x40] sm:$0xff]
        %v1200 = vld [vmem:[%s10 + $0x48] sm:$0xff]
        %v1201 = vld [vmem:[%s10 + $0x50] sm:$0xff]
        %v1202 = vld [vmem:[%s10 + $0x58] sm:$0xff]
        %v1203 = vld [vmem:[%s10 + $0x60] sm:$0xff]
        %v1204 = vld [vmem:[%s10 + $0x68] sm:$0xff]
        %v1205 = vld [vmem:[%s10 + $0x70] sm:$0xff]
        %v1206 = vld [vmem:[%s10 + $0x78] sm:$0xff]
        %v1207 = vld [vmem:[%s11] sm:$0x3]
        %v1209 = vperm.slane %v1207, 0
        %v1210 = vperm.slane %v1207, 1
        %v1229 = vunpack.c.l.b16 %v1191
        %v1230 = vunpack.c.h.b16 %v1191
        %v1231 = vunpack.c.l.b16 %v1192
        %v1232 = vunpack.c.h.b16 %v1192
        %v1233 = vunpack.c.l.b16 %v1193
        %v1234 = vunpack.c.h.b16 %v1193
        %v1235 = vunpack.c.l.b16 %v1194
        %v1236 = vunpack.c.h.b16 %v1194
        %v1237 = vunpack.c.l.b16 %v1195
        %v1238 = vunpack.c.h.b16 %v1195
        %v1239 = vunpack.c.l.b16 %v1196
        %v1240 = vunpack.c.h.b16 %v1196
        %v1241 = vunpack.c.l.b16 %v1197
        %v1242 = vunpack.c.h.b16 %v1197
        %v1243 = vunpack.c.l.b16 %v1198
        %v1244 = vunpack.c.h.b16 %v1198
        %v1245 = vunpack.c.l.b16 %v1199
        %v1246 = vunpack.c.h.b16 %v1199
        %v1247 = vunpack.c.l.b16 %v1200
        %v1248 = vunpack.c.h.b16 %v1200
        %v1249 = vunpack.c.l.b16 %v1201
        %v1250 = vunpack.c.h.b16 %v1201
        %v1251 = vunpack.c.l.b16 %v1202
        %v1252 = vunpack.c.h.b16 %v1202
        %v1253 = vunpack.c.l.b16 %v1203
        %v1254 = vunpack.c.h.b16 %v1203
        %v1255 = vunpack.c.l.b16 %v1204
        %v1256 = vunpack.c.h.b16 %v1204
        %v1257 = vunpack.c.l.b16 %v1205
        %v1258 = vunpack.c.h.b16 %v1205
        %v1259 = vunpack.c.l.b16 %v1206
        %v1260 = vunpack.c.h.b16 %v1206
        %v1261 = vpack.c.b16 %v1231, %v1229
        %v1262 = vpack.c.b16 %v1232, %v1230
        %v1263 = vpack.c.b16 %v1235, %v1233
        %v1264 = vpack.c.b16 %v1236, %v1234
        %v1265 = vpack.c.b16 %v1239, %v1237
        %v1266 = vpack.c.b16 %v1240, %v1238
        %v1267 = vpack.c.b16 %v1243, %v1241
        %v1268 = vpack.c.b16 %v1244, %v1242
        %v1269 = vpack.c.b16 %v1247, %v1245
        %v1270 = vpack.c.b16 %v1248, %v1246
        %v1271 = vpack.c.b16 %v1251, %v1249
        %v1272 = vpack.c.b16 %v1252, %v1250
        %v1273 = vpack.c.b16 %v1255, %v1253
        %v1274 = vpack.c.b16 %v1256, %v1254
        %v1275 = vpack.c.b16 %v1259, %v1257
        %v1276 = vpack.c.b16 %v1260, %v1258
        %1293 = vmatpush.bf16.msra.mxu0 %v1275
        %1294 = vmatpush.bf16.msra.mxu0 %v1273
        %1295 = vmatpush.bf16.msra.mxu0 %v1271
        %1296 = vmatpush.bf16.msra.mxu0 %v1269
        %1297 = vmatpush.bf16.msra.mxu0 %v1267
        %1298 = vmatpush.bf16.msra.mxu0 %v1265
        %1299 = vmatpush.bf16.msra.mxu0 %v1263
        %1300 = vmatpush.bf16.msra.mxu0 %v1261
        %1301 = vmatmul.bf16.gmra.mxu0 %v1190
        %v1302 = vpop.f32.mrf.mxu0
        %v1303 = vadd.f32 %v1209, %v1302
        %v1304 = vpop.f32.mrf.mxu0
        %v1305 = vadd.f32 %v1209, %v1304
        %1306 = vdwg.mxu0
        %1307 = vmatpush.bf16.msra.mxu0 %v1276
        %1308 = vmatpush.bf16.msra.mxu0 %v1274
        %1309 = vmatpush.bf16.msra.mxu0 %v1272
        %1310 = vmatpush.bf16.msra.mxu0 %v1270
        %1311 = vmatpush.bf16.msra.mxu0 %v1268
        %1312 = vmatpush.bf16.msra.mxu0 %v1266
        %1313 = vmatpush.bf16.msra.mxu0 %v1264
        %1314 = vmatpush.bf16.msra.mxu0 %v1262
        %1315 = vmatmul.bf16.gmra.mxu0 %v1190
        %v1316 = vpop.f32.mrf.mxu0
        %v1317 = vadd.f32 %v1210, %v1316
        %v1318 = vpop.f32.mrf.mxu0
        %v1319 = vadd.f32 %v1210, %v1318
        %1320 = vdwg.mxu0
        %v1321 = vmul.f32 %v1303, %v1303
        %v1322 = vmul.f32 %v1317, %v1317
        %v1323 = vmul.f32 %v1305, %v1305
        %v1324 = vmul.f32 %v1319, %v1319
        %v1325 = vmul.f32 %v1303, %v1321
        %v1326 = vmul.f32 %v1317, %v1322
        %v1327 = vmul.f32 %v1305, %v1323
        %v1328 = vmul.f32 %v1319, %v1324
        %v1329 = vmul.f32 %v1325, 0.044715
        %v1330 = vmul.f32 %v1326, 0.044715
        %v1331 = vmul.f32 %v1327, 0.044715
        %v1332 = vmul.f32 %v1328, 0.044715
        %v1333 = vadd.f32 %v1303, %v1329
        %v1334 = vadd.f32 %v1317, %v1330
        %v1335 = vadd.f32 %v1305, %v1331
        %v1336 = vadd.f32 %v1319, %v1332
        %v1337 = vmul.f32 %v1333, 0.7978846
        %v1338 = vmul.f32 %v1334, 0.7978846
        %v1339 = vmul.f32 %v1335, 0.7978846
        %v1340 = vmul.f32 %v1336, 0.7978846
        %v1341 = vtanh.pop %v1337
        %v1342 = vtanh.pop %v1338
        %v1343 = vtanh.pop %v1339
        %v1344 = vtanh.pop %v1340
        %v1345 = vadd.f32 %v1341, 1.0
        %v1346 = vadd.f32 %v1342, 1.0
        %v1347 = vadd.f32 %v1343, 1.0
        %v1348 = vadd.f32 %v1344, 1.0
        %v1349 = vmul.f32 %v1345, 0.5
        %v1350 = vmul.f32 %v1346, 0.5
        %v1351 = vmul.f32 %v1347, 0.5
        %v1352 = vmul.f32 %v1348, 0.5
        %v1353 = vmul.f32 %v1303, %v1349
        %v1354 = vmul.f32 %v1317, %v1350
        %v1355 = vmul.f32 %v1305, %v1351
        %v1356 = vmul.f32 %v1319, %v1352
        %v1357 = vpack.c.bf16 %v1355, %v1353
        %v1358 = vpack.c.bf16 %v1356, %v1354
        %v1359 = vld [vmem:[%s12] sm:$0xf]
        %v1360 = vld [vmem:[%s12 + $0x4] sm:$0xf]
        %v1361 = vld [vmem:[%s12 + $0x8] sm:$0xf]
        %v1362 = vld [vmem:[%s12 + $0xc] sm:$0xf]
        %v1363 = vld [vmem:[%s12 + $0x10] sm:$0xf]
        %v1364 = vld [vmem:[%s12 + $0x14] sm:$0xf]
        %v1365 = vld [vmem:[%s12 + $0x18] sm:$0xf]
        %v1366 = vld [vmem:[%s12 + $0x1c] sm:$0xf]
        %v1367 = vld [vmem:[%s12 + $0x20] sm:$0xf]
        %v1368 = vld [vmem:[%s12 + $0x24] sm:$0xf]
        %v1369 = vld [vmem:[%s12 + $0x28] sm:$0xf]
        %v1370 = vld [vmem:[%s12 + $0x2c] sm:$0xf]
        %v1371 = vld [vmem:[%s12 + $0x30] sm:$0xf]
        %v1372 = vld [vmem:[%s12 + $0x34] sm:$0xf]
        %v1373 = vld [vmem:[%s12 + $0x38] sm:$0xf]
        %v1374 = vld [vmem:[%s12 + $0x3c] sm:$0xf]
        %v1375 = vld [vmem:[%s12 + $0x40] sm:$0xf]
        %v1376 = vld [vmem:[%s12 + $0x44] sm:$0xf]
        %v1377 = vld [vmem:[%s12 + $0x48] sm:$0xf]
        %v1378 = vld [vmem:[%s12 + $0x4c] sm:$0xf]
        %v1379 = vld [vmem:[%s12 + $0x50] sm:$0xf]
        %v1380 = vld [vmem:[%s12 + $0x54] sm:$0xf]
        %v1381 = vld [vmem:[%s12 + $0x58] sm:$0xf]
        %v1382 = vld [vmem:[%s12 + $0x5c] sm:$0xf]
        %v1383 = vld [vmem:[%s12 + $0x60] sm:$0xf]
        %v1384 = vld [vmem:[%s12 + $0x64] sm:$0xf]
        %v1385 = vld [vmem:[%s12 + $0x68] sm:$0xf]
        %v1386 = vld [vmem:[%s12 + $0x6c] sm:$0xf]
        %v1387 = vld [vmem:[%s12 + $0x70] sm:$0xf]
        %v1388 = vld [vmem:[%s12 + $0x74] sm:$0xf]
        %v1389 = vld [vmem:[%s12 + $0x78] sm:$0xf]
        %v1390 = vld [vmem:[%s12 + $0x7c] sm:$0xf]
        %v1423 = vunpack.c.l.b16 %v1359
        %v1424 = vunpack.c.l.b16 %v1360
        %v1425 = vunpack.c.l.b16 %v1361
        %v1426 = vunpack.c.l.b16 %v1362
        %v1427 = vunpack.c.l.b16 %v1363
        %v1428 = vunpack.c.l.b16 %v1364
        %v1429 = vunpack.c.l.b16 %v1365
        %v1430 = vunpack.c.l.b16 %v1366
        %v1431 = vunpack.c.l.b16 %v1367
        %v1432 = vunpack.c.l.b16 %v1368
        %v1433 = vunpack.c.l.b16 %v1369
        %v1434 = vunpack.c.l.b16 %v1370
        %v1435 = vunpack.c.l.b16 %v1371
        %v1436 = vunpack.c.l.b16 %v1372
        %v1437 = vunpack.c.l.b16 %v1373
        %v1438 = vunpack.c.l.b16 %v1374
        %v1439 = vunpack.c.l.b16 %v1375
        %v1440 = vunpack.c.l.b16 %v1376
        %v1441 = vunpack.c.l.b16 %v1377
        %v1442 = vunpack.c.l.b16 %v1378
        %v1443 = vunpack.c.l.b16 %v1379
        %v1444 = vunpack.c.l.b16 %v1380
        %v1445 = vunpack.c.l.b16 %v1381
        %v1446 = vunpack.c.l.b16 %v1382
        %v1447 = vunpack.c.l.b16 %v1383
        %v1448 = vunpack.c.l.b16 %v1384
        %v1449 = vunpack.c.l.b16 %v1385
        %v1450 = vunpack.c.l.b16 %v1386
        %v1451 = vunpack.c.l.b16 %v1387
        %v1452 = vunpack.c.l.b16 %v1388
        %v1453 = vunpack.c.l.b16 %v1389
        %v1454 = vunpack.c.l.b16 %v1390
        %v1455 = vpack.c.b16 %v1424, %v1423
        %v1456 = vpack.c.b16 %v1426, %v1425
        %v1457 = vpack.c.b16 %v1428, %v1427
        %v1458 = vpack.c.b16 %v1430, %v1429
        %v1459 = vpack.c.b16 %v1432, %v1431
        %v1460 = vpack.c.b16 %v1434, %v1433
        %v1461 = vpack.c.b16 %v1436, %v1435
        %v1462 = vpack.c.b16 %v1438, %v1437
        %v1463 = vpack.c.b16 %v1440, %v1439
        %v1464 = vpack.c.b16 %v1442, %v1441
        %v1465 = vpack.c.b16 %v1444, %v1443
        %v1466 = vpack.c.b16 %v1446, %v1445
        %v1467 = vpack.c.b16 %v1448, %v1447
        %v1468 = vpack.c.b16 %v1450, %v1449
        %v1469 = vpack.c.b16 %v1452, %v1451
        %v1470 = vpack.c.b16 %v1454, %v1453
        %1487 = vmatpush.bf16.msra.mxu0 %v1462
        %1488 = vmatpush.bf16.msra.mxu0 %v1461
        %1489 = vmatpush.bf16.msra.mxu0 %v1460
        %1490 = vmatpush.bf16.msra.mxu0 %v1459
        %1491 = vmatpush.bf16.msra.mxu0 %v1458
        %1492 = vmatpush.bf16.msra.mxu0 %v1457
        %1493 = vmatpush.bf16.msra.mxu0 %v1456
        %1494 = vmatpush.bf16.msra.mxu0 %v1455
        %1495 = vmatmul.bf16.gmra.mxu0 %v1357
        %v1496 = vpop.f32.mrf.mxu0
        %v1497 = vadd.f32 0.0, %v1496
        %v1498 = vpop.f32.mrf.mxu0
        %1499 = vdwg.mxu0
        %1500 = vmatpush.bf16.msra.mxu0 %v1470
        %1501 = vmatpush.bf16.msra.mxu0 %v1469
        %1502 = vmatpush.bf16.msra.mxu0 %v1468
        %1503 = vmatpush.bf16.msra.mxu0 %v1467
        %1504 = vmatpush.bf16.msra.mxu0 %v1466
        %1505 = vmatpush.bf16.msra.mxu0 %v1465
        %1506 = vmatpush.bf16.msra.mxu0 %v1464
        %1507 = vmatpush.bf16.msra.mxu0 %v1463
        %1508 = vmatmul.bf16.gmra.mxu0 %v1358
        %v1509 = vpop.f32.mrf.mxu0
        %v1510 = vadd.f32 %v1497, %v1509
        %v1511 = vpop.f32.mrf.mxu0
        %1512 = vdwg.mxu0
        %v1513 = vadd.f32 %v1188, %v1510
        %v1514 = vld [vmem:[%s13] sm:$0x1]
        %v1516 = vperm.slane %v1514, 0
        %v1518 = vadd.f32 %v1513, %v1516
        %1519 = vadd.xlane.f32.xlu0 %v1518
        %v1520 = vpop.xlane.xlu0 %1519
        %v1521 = vmul.f32 %v1520, %v708
        %v1522 = vsub.f32 %v1518, %v1521
        %v1523 = vmul.f32 %v1522, %v1522
        %1524 = vadd.xlane.f32.xlu0 %v1523
        %v1525 = vpop.xlane.xlu0 %1524
        %v1526 = vmul.f32 %v1525, %v708
        %v1527 = vadd.f32 %v1526, 1e-12
        %v1528 = vrsqrt.pop %v1527
        %v1529 = vmul.f32 %v1528, %v1527
        %v1530 = vmul.f32 %v1529, %v1528
        %v1531 = vmul.f32 0.5, %v1530
        %v1532 = vsub.f32 1.5, %v1531
        %v1533 = vmul.f32 %v1528, %v1532
        %vm1534 = vweird.f32 %v1527
        %vm1535 = vweird.f32 %v1528
        %vm1536 = vmor %vm1534, %vm1535
        %v1537 = vsel %vm1536, %v1528, %v1533
        %v1538 = vmul.f32 %v1522, %v1537
        %v1539 = vld [vmem:[%s14] sm:$0x1]
        %v1541 = vperm.slane %v1539, 0
        %v1543 = vmul.f32 %v1538, %v1541
        %v1544 = vld [vmem:[%s15] sm:$0x1]
        %v1546 = vperm.slane %v1544, 0
        %v1548 = vadd.f32 %v1543, %v1546
        %v1549 = vpack.c.bf16 %v1548, %v1548
        %v1550 = vld [vmem:[%s16] sm:$0xf]
        %v1551 = vld [vmem:[%s16 + $0x4] sm:$0xf]
        %v1552 = vld [vmem:[%s16 + $0x8] sm:$0xf]
        %v1553 = vld [vmem:[%s16 + $0xc] sm:$0xf]
        %v1554 = vld [vmem:[%s16 + $0x10] sm:$0xf]
        %v1555 = vld [vmem:[%s16 + $0x14] sm:$0xf]
        %v1556 = vld [vmem:[%s16 + $0x18] sm:$0xf]
        %v1557 = vld [vmem:[%s16 + $0x1c] sm:$0xf]
        %v1558 = vld [vmem:[%s16 + $0x20] sm:$0xf]
        %v1559 = vld [vmem:[%s16 + $0x24] sm:$0xf]
        %v1560 = vld [vmem:[%s16 + $0x28] sm:$0xf]
        %v1561 = vld [vmem:[%s16 + $0x2c] sm:$0xf]
        %v1562 = vld [vmem:[%s16 + $0x30] sm:$0xf]
        %v1563 = vld [vmem:[%s16 + $0x34] sm:$0xf]
        %v1564 = vld [vmem:[%s16 + $0x38] sm:$0xf]
        %v1565 = vld [vmem:[%s16 + $0x3c] sm:$0xf]
        %v1566 = vld [vmem:[%s17] sm:$0x1]
        %v1583 = vunpack.c.l.b16 %v1550
        %v1584 = vunpack.c.l.b16 %v1551
        %v1585 = vunpack.c.l.b16 %v1552
        %v1586 = vunpack.c.l.b16 %v1553
        %v1587 = vunpack.c.l.b16 %v1554
        %v1588 = vunpack.c.l.b16 %v1555
        %v1589 = vunpack.c.l.b16 %v1556
        %v1590 = vunpack.c.l.b16 %v1557
        %v1591 = vunpack.c.l.b16 %v1558
        %v1592 = vunpack.c.l.b16 %v1559
        %v1593 = vunpack.c.l.b16 %v1560
        %v1594 = vunpack.c.l.b16 %v1561
        %v1595 = vunpack.c.l.b16 %v1562
        %v1596 = vunpack.c.l.b16 %v1563
        %v1597 = vunpack.c.l.b16 %v1564
        %v1598 = vunpack.c.l.b16 %v1565
        %v1599 = vpack.c.b16 %v1584, %v1583
        %v1600 = vpack.c.b16 %v1586, %v1585
        %v1601 = vpack.c.b16 %v1588, %v1587
        %v1602 = vpack.c.b16 %v1590, %v1589
        %v1603 = vpack.c.b16 %v1592, %v1591
        %v1604 = vpack.c.b16 %v1594, %v1593
        %v1605 = vpack.c.b16 %v1596, %v1595
        %v1606 = vpack.c.b16 %v1598, %v1597
        %1615 = vmatpush.bf16.msra.mxu0 %v1606
        %1616 = vmatpush.bf16.msra.mxu0 %v1605
        %1617 = vmatpush.bf16.msra.mxu0 %v1604
        %1618 = vmatpush.bf16.msra.mxu0 %v1603
        %1619 = vmatpush.bf16.msra.mxu0 %v1602
        %1620 = vmatpush.bf16.msra.mxu0 %v1601
        %1621 = vmatpush.bf16.msra.mxu0 %v1600
        %1622 = vmatpush.bf16.msra.mxu0 %v1599
        %1623 = vmatmul.bf16.gmra.mxu0 %v1549
        %v1624 = vpop.f32.mrf.mxu0
        %v1625 = vadd.f32 %v1566, %v1624
        %v1626 = vpop.f32.mrf.mxu0
        %1627 = vdwg.mxu0
        %v1628 = vtanh.pop %v1625
        %v1629 = vpack.c.bf16 %v1628, %v1628
        %v1630 = vld [vmem:[%s18] sm:$0xf]
        %v1631 = vld [vmem:[%s18 + $0x4] sm:$0xf]
        %v1632 = vld [vmem:[%s18 + $0x8] sm:$0xf]
        %v1633 = vld [vmem:[%s18 + $0xc] sm:$0xf]
        %v1634 = vld [vmem:[%s18 + $0x10] sm:$0xf]
        %v1635 = vld [vmem:[%s18 + $0x14] sm:$0xf]
        %v1636 = vld [vmem:[%s18 + $0x18] sm:$0xf]
        %v1637 = vld [vmem:[%s18 + $0x1c] sm:$0xf]
        %v1638 = vld [vmem:[%s18 + $0x20] sm:$0xf]
        %v1639 = vld [vmem:[%s18 + $0x24] sm:$0xf]
        %v1640 = vld [vmem:[%s18 + $0x28] sm:$0xf]
        %v1641 = vld [vmem:[%s18 + $0x2c] sm:$0xf]
        %v1642 = vld [vmem:[%s18 + $0x30] sm:$0xf]
        %v1643 = vld [vmem:[%s18 + $0x34] sm:$0xf]
        %v1644 = vld [vmem:[%s18 + $0x38] sm:$0xf]
        %v1645 = vld [vmem:[%s18 + $0x3c] sm:$0xf]
        %v1646 = vld [vmem:[%s19] sm:$0x1]
        %v1663 = vunpack.c.l.b16 %v1630
        %v1664 = vunpack.c.l.b16 %v1631
        %v1665 = vunpack.c.l.b16 %v1632
        %v1666 = vunpack.c.l.b16 %v1633
        %v1667 = vunpack.c.l.b16 %v1634
        %v1668 = vunpack.c.l.b16 %v1635
        %v1669 = vunpack.c.l.b16 %v1636
        %v1670 = vunpack.c.l.b16 %v1637
        %v1671 = vunpack.c.l.b16 %v1638
        %v1672 = vunpack.c.l.b16 %v1639
        %v1673 = vunpack.c.l.b16 %v1640
        %v1674 = vunpack.c.l.b16 %v1641
        %v1675 = vunpack.c.l.b16 %v1642
        %v1676 = vunpack.c.l.b16 %v1643
        %v1677 = vunpack.c.l.b16 %v1644
        %v1678 = vunpack.c.l.b16 %v1645
        %v1679 = vpack.c.b16 %v1664, %v1663
        %v1680 = vpack.c.b16 %v1666, %v1665
        %v1681 = vpack.c.b16 %v1668, %v1667
        %v1682 = vpack.c.b16 %v1670, %v1669
        %v1683 = vpack.c.b16 %v1672, %v1671
        %v1684 = vpack.c.b16 %v1674, %v1673
        %v1685 = vpack.c.b16 %v1676, %v1675
        %v1686 = vpack.c.b16 %v1678, %v1677
        %1695 = vmatpush.bf16.msra.mxu0 %v1686
        %1696 = vmatpush.bf16.msra.mxu0 %v1685
        %1697 = vmatpush.bf16.msra.mxu0 %v1684
        %1698 = vmatpush.bf16.msra.mxu0 %v1683
        %1699 = vmatpush.bf16.msra.mxu0 %v1682
        %1700 = vmatpush.bf16.msra.mxu0 %v1681
        %1701 = vmatpush.bf16.msra.mxu0 %v1680
        %1702 = vmatpush.bf16.msra.mxu0 %v1679
        %1703 = vmatmul.bf16.gmra.mxu0 %v1629
        %v1704 = vpop.f32.mrf.mxu0
        %v1705 = vadd.f32 %v1646, %v1704
        %v1706 = vpop.f32.mrf.mxu0
        %1707 = vdwg.mxu0
        %v1708 = vpack.c.bf16 %v1705, %v1705
        %v1709 = vld [vmem:[%s20] sm:$0xf]
        %v1710 = vld [vmem:[%s20 + $0x4] sm:$0xf]
        %v1711 = vld [vmem:[%s20 + $0x8] sm:$0xf]
        %v1712 = vld [vmem:[%s20 + $0xc] sm:$0xf]
        %v1713 = vld [vmem:[%s20 + $0x10] sm:$0xf]
        %v1714 = vld [vmem:[%s20 + $0x14] sm:$0xf]
        %v1715 = vld [vmem:[%s20 + $0x18] sm:$0xf]
        %v1716 = vld [vmem:[%s20 + $0x1c] sm:$0xf]
        %v1717 = vld [vmem:[%s20 + $0x20] sm:$0xf]
        %v1718 = vld [vmem:[%s20 + $0x24] sm:$0xf]
        %v1719 = vld [vmem:[%s20 + $0x28] sm:$0xf]
        %v1720 = vld [vmem:[%s20 + $0x2c] sm:$0xf]
        %v1721 = vld [vmem:[%s20 + $0x30] sm:$0xf]
        %v1722 = vld [vmem:[%s20 + $0x34] sm:$0xf]
        %v1723 = vld [vmem:[%s20 + $0x38] sm:$0xf]
        %v1724 = vld [vmem:[%s20 + $0x3c] sm:$0xf]
        %v1725 = vld [vmem:[%s21] sm:$0x1]
        %v1742 = vunpack.c.l.b16 %v1709
        %v1743 = vunpack.c.l.b16 %v1710
        %v1744 = vunpack.c.l.b16 %v1711
        %v1745 = vunpack.c.l.b16 %v1712
        %v1746 = vunpack.c.l.b16 %v1713
        %v1747 = vunpack.c.l.b16 %v1714
        %v1748 = vunpack.c.l.b16 %v1715
        %v1749 = vunpack.c.l.b16 %v1716
        %v1750 = vunpack.c.l.b16 %v1717
        %v1751 = vunpack.c.l.b16 %v1718
        %v1752 = vunpack.c.l.b16 %v1719
        %v1753 = vunpack.c.l.b16 %v1720
        %v1754 = vunpack.c.l.b16 %v1721
        %v1755 = vunpack.c.l.b16 %v1722
        %v1756 = vunpack.c.l.b16 %v1723
        %v1757 = vunpack.c.l.b16 %v1724
        %v1758 = vpack.c.b16 %v1743, %v1742
        %v1759 = vpack.c.b16 %v1745, %v1744
        %v1760 = vpack.c.b16 %v1747, %v1746
        %v1761 = vpack.c.b16 %v1749, %v1748
        %v1762 = vpack.c.b16 %v1751, %v1750
        %v1763 = vpack.c.b16 %v1753, %v1752
        %v1764 = vpack.c.b16 %v1755, %v1754
        %v1765 = vpack.c.b16 %v1757, %v1756
        %1774 = vmatpush.bf16.msra.mxu0 %v1765
        %1775 = vmatpush.bf16.msra.mxu0 %v1764
        %1776 = vmatpush.bf16.msra.mxu0 %v1763
        %1777 = vmatpush.bf16.msra.mxu0 %v1762
        %1778 = vmatpush.bf16.msra.mxu0 %v1761
        %1779 = vmatpush.bf16.msra.mxu0 %v1760
        %1780 = vmatpush.bf16.msra.mxu0 %v1759
        %1781 = vmatpush.bf16.msra.mxu0 %v1758
        %1782 = vmatmul.bf16.gmra.mxu0 %v1708
        %v1783 = vpop.f32.mrf.mxu0
        %v1784 = vadd.f32 %v1725, %v1783
        %v1785 = vpop.f32.mrf.mxu0
        %1786 = vdwg.mxu0
        %1787 = vst [vmem:[%s686] sm:$0x1] %v1784
        %s1788 = sand.u32 %s516, 1
        %s1789 = scalar_lea.sflag [#allocation3], %s1788
        %s1790 = sand.u32 %s516, 1
        %s1791 = scalar_lea.vmem [#allocation2], %s1790
        // Predicated region
        $region109: #{space_classifier_forward.1} parent=107 // pred_check
          %p1792 = pneg %p526
        $region110: #{space_classifier_forward.1} parent=107 // pred_check_branch
          %1794 = sbr.rel (%p1792) target = $region112
        $region111: #{space_classifier_forward.1} parent=107 // pred_region
          %1796 = vsyncadd %s1789, 0
          %s1797 = scalar_lea.hbm %s22, %s36
          %s1799 = sshll.u32 %s1791, 4
          %s1800 = int_to_ptr.vmem [resolvable:$true] %s1799
          %s1801 = sshll.u32 %s1797, 4
          %s1802 = int_to_ptr.hbm [resolvable:$true] %s1801
          %1804 = dma.vmem_to_hbm [thread:$0]  %s1800, 16, %s1802, %s1789
        $region112: #{space_classifier_forward.1} parent=107 // pred_fallthru
          _
      $region108: #{space_classifier_forward.1} parent=5 // pred_fallthru
        _
      %p1805 = scmp.le.s32.totalorder 2, %s31
      // Predicated region
      $region113: #{space_classifier_forward.1} parent=5 // pred_check
        %p1806 = pneg %p1805
      $region114: #{space_classifier_forward.1} parent=5 // pred_check_branch
        %1808 = sbr.rel (%p1806) target = $region116
      $region115: #{space_classifier_forward.1} parent=5 // pred_region
        %s1809 = ssub.s32 %s31, 2
        // Predicated region
        $region117: #{space_classifier_forward.1} parent=115 // pred_check
          %p1810 = pneg %p532
        $region118: #{space_classifier_forward.1} parent=115 // pred_check_branch
          %1812 = sbr.rel (%p1810) target = $region120
        $region119: #{space_classifier_forward.1} parent=115 // pred_region
          %s1813 = sand.u32 %s517, 1
          %s1814 = scalar_lea.sflag [#allocation3], %s1813
          %s1815 = sand.u32 %s517, 1
          %s1816 = scalar_lea.vmem [#allocation2], %s1815
          %1818 = dma.done %s1814, 16
        $region120: #{space_classifier_forward.1} parent=115 // pred_fallthru
          _
      $region116: #{space_classifier_forward.1} parent=5 // pred_fallthru
        _
    $region6: #{space_classifier_forward.1} parent=1 // loop_footer
      %s35 = sadd.s32 1, %s31
    $region7: #{space_classifier_forward.1} parent=1 // loop_footer_branch
      %30 = sbr.rel target = $region3
    $region8: #{space_classifier_forward.1} parent=1 // loop_exit
      _
    %1819 = vsyncpa [#allocation3], 1
    %s1820 = scalar_lea.sflag [#allocation3], 1
    %1821 = vsyncpa %s1820, 1

</llo_original>
